<compile_context>
chip_gen: v7x
topology: tpu7x:2x2x1
jax: 0.10.0
libtpu: 0.0.40
codegen_flags: <defaults>
</compile_context>

<pallas_src>
import functools

import jax
import jax.numpy as jnp
from jax.experimental import pallas as pl
from jax.experimental.pallas import tpu as pltpu

# Accurate f32 contractions everywhere (wrapper weight folding, reference, and
# the in-kernel MXU dots) so the kernel/reference comparison is meaningful.
jax.config.update("jax_default_matmul_precision", "highest")


def _gat_kernel(hs_ref, ho_ref, w_ref, was_ref, wao_ref, b_ref, out_ref,
                *, B, N, n_head, f_out):
    HF = n_head * f_out

    hs = hs_ref[...]                                    # (B*N, f_in)
    ho = ho_ref[...]                                    # (B*N, f_in)

    # h_other' for every head in one lane-dense MXU matmul: (B*N, n_head*f_out).
    hop = jnp.dot(ho, w_ref[...], preferred_element_type=jnp.float32)

    # Attention logits.  was/wao already hold W_h @ a_top / W_h @ a_bot folded
    # per head and duplicated across that head's f_out lanes, so `e` lands
    # directly in the same (head*f_out) lane layout as `hop`.
    e = (jnp.dot(hs, was_ref[...], preferred_element_type=jnp.float32)
         + jnp.dot(ho, wao_ref[...], preferred_element_type=jnp.float32))
    e = jnp.where(e > 0, e, 0.2 * e)                    # LeakyReLU(0.2)

    # Stable softmax over the neighbor axis (torch dim=-2).
    e3 = e.reshape(B, N, HF)                            # sublane-group split only
    hop3 = hop.reshape(B, N, HF)
    m = jnp.max(e3, axis=1, keepdims=True)              # (B, 1, HF)
    p = jnp.exp(e3 - m)
    denom = jnp.sum(p, axis=1, keepdims=True)           # (B, 1, HF)
    r = pl.reciprocal(denom, approx=True)               # EUP slot
    r = r * (2.0 - denom * r)                           # one NR step -> f32 accuracy
    alpha = p * r                                       # (B, N, HF)

    # alpha * h_other', summed over neighbors -> per-head partials (B, HF).
    partial = jnp.sum(alpha * hop3, axis=1)

    # Mean over heads via static lane slices, then ReLU + bias.
    acc = partial[:, 0:f_out]
    for h in range(1, n_head):
        acc = acc + partial[:, h * f_out:(h + 1) * f_out]
    out_ref[...] = jnp.maximum(acc * (1.0 / n_head), 0.0) + b_ref[...]


@jax.jit
def gat_forward(h_self, h_other, goal, action, w, a, bias):
    # goal / action are unused by the reference forward; accepted for parity.
    del goal, action
    n_head, _, f_in, f_out = w.shape
    B, N, _ = h_self.shape
    HF = n_head * f_out

    w3 = w.reshape(n_head, f_in, f_out).astype(jnp.float32)
    # Heads folded into the lane dim: (f_in, n_head*f_out) (lane-dense: 128 here).
    w_fold = jnp.transpose(w3, (1, 0, 2)).reshape(f_in, HF)

    a2 = a.reshape(2 * f_out).astype(jnp.float32)
    a_top, a_bot = a2[:f_out], a2[f_out:]
    # Fold W_h @ a into per-head vectors (deletes the h_self projection), then
    # duplicate each head's column across its f_out lanes so the in-kernel
    # logit matmul produces the (head*f_out) lane layout directly.
    wa_self = jnp.einsum("hfo,o->fh", w3, a_top)        # (f_in, n_head)
    wa_other = jnp.einsum("hfo,o->fh", w3, a_bot)       # (f_in, n_head)
    wa_self_rep = jnp.repeat(wa_self, f_out, axis=1)    # (f_in, n_head*f_out)
    wa_other_rep = jnp.repeat(wa_other, f_out, axis=1)  # (f_in, n_head*f_out)

    b2 = bias.reshape(1, f_out).astype(jnp.float32)
    hs_flat = h_self.astype(jnp.float32).reshape(B * N, f_in)
    ho_flat = h_other.astype(jnp.float32).reshape(B * N, f_in)

    kernel = functools.partial(_gat_kernel, B=B, N=N, n_head=n_head, f_out=f_out)
    vmem = pl.BlockSpec(memory_space=pltpu.MemorySpace.VMEM)
    return pl.pallas_call(
        kernel,
        out_shape=jax.ShapeDtypeStruct((B, f_out), jnp.float32),
        in_specs=[vmem] * 6,
        out_specs=vmem,
    )(hs_flat, ho_flat, w_fold, wa_self_rep, wa_other_rep, b2)


def ref_forward(h_self, h_other, w, a, bias):
    # Pure-JAX mirror of the PyTorch forward for correctness checking.
    hsp = jnp.matmul(h_self, w)                   # (n_head, B, N, f_out)
    hop = jnp.matmul(h_other, w)
    hp = jnp.concatenate([hsp, hop], axis=-1)     # (n_head, B, N, 2*f_out)
    e = jnp.matmul(hp, a)                         # (n_head, B, N, 1)
    e = jnp.where(e > 0, e, 0.2 * e)
    alpha = jax.nn.softmax(e, axis=-2)
    h_attn = alpha * hop
    out = jnp.mean(jnp.sum(h_attn, axis=-2), axis=0)   # (B, f_out)
    return jax.nn.relu(out) + bias


if __name__ == "__main__":
    # Module config (distance_embedding_dim and attn_dropout are unused in forward).
    n_head, f_in, f_out = 4, 16, 32
    B, N = 2, 8

    key = jax.random.PRNGKey(0)
    k_w, k_a, k_hs, k_ho, k_g, k_ac = jax.random.split(key, 6)

    # Deterministic xavier-uniform-style init (gain=1.414).
    gain = 1.414
    bw = gain * (6.0 / (f_in + f_out)) ** 0.5
    w = jax.random.uniform(k_w, (n_head, 1, f_in, f_out), jnp.float32, -bw, bw)
    ba = gain * (6.0 / (2 * f_out + 1)) ** 0.5
    a = jax.random.uniform(k_a, (1, 1, 2 * f_out, 1), jnp.float32, -ba, ba)
    bias = jnp.zeros((f_out,), jnp.float32)

    h_self = jax.random.normal(k_hs, (B, N, f_in), jnp.float32)
    h_other = jax.random.normal(k_ho, (B, N, f_in), jnp.float32)
    goal = jax.random.normal(k_g, (B, 4), jnp.float32)      # unused by forward
    action = jax.random.normal(k_ac, (B, 2), jnp.float32)   # unused by forward

    out = gat_forward(h_self, h_other, goal, action, w, a, bias)
    out = jax.block_until_ready(out)

    ref = ref_forward(h_self, h_other, w, a, bias)
    assert out.shape == (B, f_out)
    assert jnp.allclose(out, ref, atol=1e-4, rtol=1e-4), (
        f"max err {jnp.max(jnp.abs(out - ref))}")

    print("KERNEL_OK")
</pallas_src>

<mosaic_0001>
module attributes {stable_mosaic.version = 11 : i64} {
  func.func @_gat_kernel(%arg0: memref<16x16xf32, #tpu.memory_space<vmem>>, %arg1: memref<16x16xf32, #tpu.memory_space<vmem>>, %arg2: memref<16x128xf32, #tpu.memory_space<vmem>>, %arg3: memref<16x128xf32, #tpu.memory_space<vmem>>, %arg4: memref<16x128xf32, #tpu.memory_space<vmem>>, %arg5: memref<1x32xf32, #tpu.memory_space<vmem>>, %arg6: memref<2x32xf32, #tpu.memory_space<vmem>>) attributes {dimension_semantics = [], scalar_prefetch = 0 : i64, scratch_operands = 0 : i64, tpu.core_type = #tpu.core_type<tc>} {
    %c0 = arith.constant 0 : index
    %c0_0 = arith.constant 0 : index
    %0 = vector.load %arg0[%c0, %c0_0] : memref<16x16xf32, #tpu.memory_space<vmem>>, vector<16x16xf32>
    %c0_1 = arith.constant 0 : index
    %c0_2 = arith.constant 0 : index
    %1 = vector.load %arg1[%c0_1, %c0_2] : memref<16x16xf32, #tpu.memory_space<vmem>>, vector<16x16xf32>
    %c0_3 = arith.constant 0 : index
    %c0_4 = arith.constant 0 : index
    %2 = vector.load %arg2[%c0_3, %c0_4] : memref<16x128xf32, #tpu.memory_space<vmem>>, vector<16x128xf32>
    %cst = arith.constant dense<0.000000e+00> : vector<16x128xf32>
    %3 = tpu.matmul %1, %2, %cst {dimension_numbers = #tpu.dot_dimension_numbers<[1], [0], [0], [1], [0, 0, 1, 1], [], []>, precision = #tpu.contract_precision<fp32>} : vector<16x16xf32>, vector<16x128xf32>, vector<16x128xf32> -> vector<16x128xf32>
    %c0_5 = arith.constant 0 : index
    %c0_6 = arith.constant 0 : index
    %4 = vector.load %arg3[%c0_5, %c0_6] : memref<16x128xf32, #tpu.memory_space<vmem>>, vector<16x128xf32>
    %cst_7 = arith.constant dense<0.000000e+00> : vector<16x128xf32>
    %5 = tpu.matmul %0, %4, %cst_7 {dimension_numbers = #tpu.dot_dimension_numbers<[1], [0], [0], [1], [0, 0, 1, 1], [], []>, precision = #tpu.contract_precision<fp32>} : vector<16x16xf32>, vector<16x128xf32>, vector<16x128xf32> -> vector<16x128xf32>
    %c0_8 = arith.constant 0 : index
    %c0_9 = arith.constant 0 : index
    %6 = vector.load %arg4[%c0_8, %c0_9] : memref<16x128xf32, #tpu.memory_space<vmem>>, vector<16x128xf32>
    %cst_10 = arith.constant dense<0.000000e+00> : vector<16x128xf32>
    %7 = tpu.matmul %1, %6, %cst_10 {dimension_numbers = #tpu.dot_dimension_numbers<[1], [0], [0], [1], [0, 0, 1, 1], [], []>, precision = #tpu.contract_precision<fp32>} : vector<16x16xf32>, vector<16x128xf32>, vector<16x128xf32> -> vector<16x128xf32>
    %8 = arith.addf %5, %7 : vector<16x128xf32>
    %cst_11 = arith.constant 0.000000e+00 : f32
    %9 = vector.broadcast %cst_11 : f32 to vector<16x128xf32>
    %10 = arith.cmpf ogt, %8, %9 : vector<16x128xf32>
    %cst_12 = arith.constant 2.000000e-01 : f32
    %11 = vector.broadcast %cst_12 : f32 to vector<16x128xf32>
    %12 = arith.mulf %11, %8 : vector<16x128xf32>
    %13 = arith.select %10, %8, %12 : vector<16x128xi1>, vector<16x128xf32>
    %14 = vector.shape_cast %13 : vector<16x128xf32> to vector<2x8x128xf32>
    %15 = vector.shape_cast %3 : vector<16x128xf32> to vector<2x8x128xf32>
    %cst_13 = arith.constant dense<0xFF800000> : vector<2x128xf32>
    %16 = vector.multi_reduction <maximumf>, %14, %cst_13 [1] : vector<2x8x128xf32> to vector<2x128xf32>
    %17 = vector.shape_cast %16 : vector<2x128xf32> to vector<2x1x128xf32>
    %18 = vector.broadcast %17 : vector<2x1x128xf32> to vector<2x8x128xf32>
    %19 = arith.subf %14, %18 : vector<2x8x128xf32>
    %20 = math.exp %19 : vector<2x8x128xf32>
    %cst_14 = arith.constant dense<0.000000e+00> : vector<2x128xf32>
    %21 = vector.multi_reduction <add>, %20, %cst_14 [1] : vector<2x8x128xf32> to vector<2x128xf32>
    %22 = vector.shape_cast %21 : vector<2x128xf32> to vector<2x1x128xf32>
    %23 = tpu.reciprocal %22 {approx = true} : vector<2x1x128xf32> -> vector<2x1x128xf32>
    %24 = arith.mulf %22, %23 : vector<2x1x128xf32>
    %cst_15 = arith.constant 2.000000e+00 : f32
    %25 = vector.broadcast %cst_15 : f32 to vector<2x1x128xf32>
    %26 = arith.subf %25, %24 : vector<2x1x128xf32>
    %27 = arith.mulf %23, %26 : vector<2x1x128xf32>
    %28 = vector.broadcast %27 : vector<2x1x128xf32> to vector<2x8x128xf32>
    %29 = arith.mulf %20, %28 : vector<2x8x128xf32>
    %30 = arith.mulf %29, %15 : vector<2x8x128xf32>
    %cst_16 = arith.constant dense<0.000000e+00> : vector<2x128xf32>
    %31 = vector.multi_reduction <add>, %30, %cst_16 [1] : vector<2x8x128xf32> to vector<2x128xf32>
    %32 = vector.extract_strided_slice %31 {offsets = [0, 0], sizes = [2, 32], strides = [1, 1]} : vector<2x128xf32> to vector<2x32xf32>
    %33 = vector.extract_strided_slice %31 {offsets = [0, 32], sizes = [2, 32], strides = [1, 1]} : vector<2x128xf32> to vector<2x32xf32>
    %34 = arith.addf %32, %33 : vector<2x32xf32>
    %35 = vector.extract_strided_slice %31 {offsets = [0, 64], sizes = [2, 32], strides = [1, 1]} : vector<2x128xf32> to vector<2x32xf32>
    %36 = arith.addf %34, %35 : vector<2x32xf32>
    %37 = vector.extract_strided_slice %31 {offsets = [0, 96], sizes = [2, 32], strides = [1, 1]} : vector<2x128xf32> to vector<2x32xf32>
    %38 = arith.addf %36, %37 : vector<2x32xf32>
    %cst_17 = arith.constant 2.500000e-01 : f32
    %39 = vector.broadcast %cst_17 : f32 to vector<2x32xf32>
    %40 = arith.mulf %38, %39 : vector<2x32xf32>
    %cst_18 = arith.constant 0.000000e+00 : f32
    %41 = vector.broadcast %cst_18 : f32 to vector<2x32xf32>
    %42 = arith.maximumf %40, %41 : vector<2x32xf32>
    %c0_19 = arith.constant 0 : index
    %c0_20 = arith.constant 0 : index
    %43 = vector.load %arg5[%c0_19, %c0_20] : memref<1x32xf32, #tpu.memory_space<vmem>>, vector<1x32xf32>
    %44 = vector.broadcast %43 : vector<1x32xf32> to vector<2x32xf32>
    %45 = arith.addf %42, %44 : vector<2x32xf32>
    %c0_21 = arith.constant 0 : index
    %c0_22 = arith.constant 0 : index
    %46 = vector.load %arg6[%c0_21, %c0_22] : memref<2x32xf32, #tpu.memory_space<vmem>>, vector<2x32xf32>
    tpu.vector_store %arg6[%c0_21, %c0_22], %45 {strides = array<i32>} : memref<2x32xf32, #tpu.memory_space<vmem>>, vector<2x32xf32>,
    return
  }
}

</mosaic_0001>

<llo_original>
// kernel: gat_forward.1
$region0: #{gat_forward.1}
  #allocation0 [shape = 'u32[]', space=smem, size = 0x4, offset = 0x4, fixed_abs, tag = 'smem constant byte address 0x4 - core index']
  #allocation1 [shape = 'u32[144,128]{1,0:T(1,128)}', space=vmem, size = 0x12000, scoped, tag = 'internal scratch']
  %s0 = inlined_call_operand.vmem [shape: f32[16,16], index: 0, kind: input, shape index: {}]
  %s1 = inlined_call_operand.vmem [shape: f32[16,16], index: 1, kind: input, shape index: {}]
  %s2 = inlined_call_operand.vmem [shape: f32[16,128], index: 2, kind: input, shape index: {}]
  %s3 = inlined_call_operand.vmem [shape: f32[16,128], index: 3, kind: input, shape index: {}]
  %s4 = inlined_call_operand.vmem [shape: f32[16,128], index: 4, kind: input, shape index: {}]
  %s5 = inlined_call_operand.vmem [shape: f32[1,32], index: 5, kind: input, shape index: {}]
  %s6 = inlined_call_operand.hbm [shape: f32[2,32], index: 6, kind: output, shape index: {}]
  %s7 = sld [smem:[#allocation0]]
  $region34: #{gat_forward.1} parent=0
    _
  %s9 = ssub.s32 1, %s7
  %s10 = scalar_select 0, %s9, %s7
  $region1: #{gat_forward.1} parent=0
    #allocation2 [shape = 'u8[1024]{0}', space=vmem, size = 0x400, scoped, tag = 'output window, operand 0, single buffered']
    #allocation3 [shape = 's32[1]{0}', space=sflag, size = 0x4, scoped, tag = 'scoped memory for gat_forward.1']
    %11 = vsyncpa [#allocation3], 0
    // Predicated region
    $region2: #{gat_forward.1} parent=1 // pred_check
      _
    $region3: #{gat_forward.1} parent=1 // pred_check_branch
      %13 = sbr.rel (0) target = $region5
    $region4: #{gat_forward.1} parent=1 // pred_region
      _
    $region5: #{gat_forward.1} parent=1 // pred_fallthru
      _
    // Predicated region
    $region6: #{gat_forward.1} parent=1 // pred_check
      _
    $region7: #{gat_forward.1} parent=1 // pred_check_branch
      %15 = sbr.rel (0) target = $region9
    $region8: #{gat_forward.1} parent=1 // pred_region
      _
    $region9: #{gat_forward.1} parent=1 // pred_fallthru
      _
    // Predicated region
    $region10: #{gat_forward.1} parent=1 // pred_check
      _
    $region11: #{gat_forward.1} parent=1 // pred_check_branch
      %17 = sbr.rel (0) target = $region13
    $region12: #{gat_forward.1} parent=1 // pred_region
      _
    $region13: #{gat_forward.1} parent=1 // pred_fallthru
      _
    // Predicated region
    $region14: #{gat_forward.1} parent=1 // pred_check
      _
    $region15: #{gat_forward.1} parent=1 // pred_check_branch
      %19 = sbr.rel (0) target = $region17
    $region16: #{gat_forward.1} parent=1 // pred_region
      _
    $region17: #{gat_forward.1} parent=1 // pred_fallthru
      _
    // Predicated region
    $region18: #{gat_forward.1} parent=1 // pred_check
      _
    $region19: #{gat_forward.1} parent=1 // pred_check_branch
      %21 = sbr.rel (0) target = $region21
    $region20: #{gat_forward.1} parent=1 // pred_region
      _
    $region21: #{gat_forward.1} parent=1 // pred_fallthru
      _
    // Predicated region
    $region22: #{gat_forward.1} parent=1 // pred_check
      _
    $region23: #{gat_forward.1} parent=1 // pred_check_branch
      %23 = sbr.rel (0) target = $region25
    $region24: #{gat_forward.1} parent=1 // pred_region
      _
    $region25: #{gat_forward.1} parent=1 // pred_fallthru
      _
    %v24 = vld [vmem:[%s0] sm:$0xff]
    %v25 = vld [vmem:[%s0 + $0x8] sm:$0xff]
    %v26 = vld [vmem:[%s1] sm:$0xff]
    %v27 = vld [vmem:[%s1 + $0x8] sm:$0xff]
    %v28 = vld [vmem:[%s2] sm:$0xff]
    %v29 = vld [vmem:[%s2 + $0x8] sm:$0xff]
    %vm30 = vcmask 130048
    %v32 = vsel %vm30, %v26, 0
    %v35 = vsel %vm30, %v27, 0
    %37 = vmatprep.subr.mxu0 0.0
    %v38 = vand.u32 %v28, 4294901760
    %39 = vmatpush1.msra.mxu0 %v38
    %40 = vmatprep.subr.mxu0 0.0
    %v41 = vand.u32 %v29, 4294901760
    %42 = vmatpush1.msra.mxu0 %v41
    %43 = vmatprep.subr.mxu0 0.0
    %44 = vmatpush1.msra.mxu0 0.0
    %45 = vmatprep.subr.mxu0 0.0
    %46 = vmatpush1.msra.mxu0 0.0
    %47 = vmatprep.subr.mxu0 0.0
    %48 = vmatpush1.msra.mxu0 0.0
    %49 = vmatprep.subr.mxu0 0.0
    %50 = vmatpush1.msra.mxu0 0.0
    %51 = vmatprep.subr.mxu0 0.0
    %52 = vmatpush1.msra.mxu0 0.0
    %53 = vmatprep.subr.mxu0 0.0
    %54 = vmatpush1.msra.mxu0 0.0
    %55 = vmatprep.subr.mxu0 0.0
    %56 = vmatpush1.msra.mxu0 0.0
    %57 = vmatprep.subr.mxu0 0.0
    %58 = vmatpush1.msra.mxu0 0.0
    %59 = vmatprep.subr.mxu0 0.0
    %60 = vmatpush1.msra.mxu0 0.0
    %61 = vmatprep.subr.mxu0 0.0
    %62 = vmatpush1.msra.mxu0 0.0
    %63 = vmatprep.subr.mxu0 0.0
    %64 = vmatpush1.msra.mxu0 0.0
    %65 = vmatprep.subr.mxu0 0.0
    %66 = vmatpush1.msra.mxu0 0.0
    %67 = vmatprep.subr.mxu0 0.0
    %68 = vmatpush1.msra.mxu0 0.0
    %69 = vmatprep.subr.mxu0 0.0
    %70 = vmatpush1.msra.mxu0 0.0
    %71 = vmatprep.subr.mxu0 0.0
    %72 = vmatpush1.msra.mxu0 0.0
    %73 = vmatprep.subr.mxu0 0.0
    %74 = vmatpush1.msra.mxu0 0.0
    %75 = vmatprep.subr.mxu0 0.0
    %76 = vmatpush1.msra.mxu0 0.0
    %77 = vmatprep.subr.mxu0 0.0
    %78 = vmatpush1.msra.mxu0 0.0
    %79 = vmatprep.subr.mxu0 0.0
    %80 = vmatpush1.msra.mxu0 0.0
    %81 = vmatprep.subr.mxu0 0.0
    %82 = vmatpush1.msra.mxu0 0.0
    %83 = vmatprep.subr.mxu0 0.0
    %84 = vmatpush1.msra.mxu0 0.0
    %85 = vmatprep.subr.mxu0 0.0
    %86 = vmatpush1.msra.mxu0 0.0
    %87 = vmatprep.subr.mxu0 0.0
    %88 = vmatpush1.msra.mxu0 0.0
    %89 = vmatprep.subr.mxu0 0.0
    %90 = vmatpush1.msra.mxu0 0.0
    %91 = vmatprep.subr.mxu0 0.0
    %92 = vmatpush1.msra.mxu0 0.0
    %93 = vmatprep.subr.mxu0 0.0
    %94 = vmatpush1.msra.mxu0 0.0
    %95 = vmatprep.subr.mxu0 0.0
    %96 = vmatpush1.msra.mxu0 0.0
    %97 = vmatprep.subr.mxu0 0.0
    %98 = vmatpush1.msra.mxu0 0.0
    %99 = vmatprep.subr.mxu0 0.0
    %100 = vmatpush1.msra.mxu0 0.0
    %101 = vmatprep.subr.mxu0 0.0
    %102 = vmatpush1.msra.mxu0 0.0
    %103 = vmatprep.mubr.f32.mxu0 0.0
    %v104 = vand.u32 %v32, 4294901760
    %v105 = vsub.f32 %v32, %v104
    %v106 = vand.u32 %v105, 4294901760
    %v107 = vsub.f32 %v105, %v106
    %v108 = vand.u32 %v107, 4294901760
    %109 = vmatmul.mubr.f32.gmra.mrb[0].mxu0 %v108
    %v110 = vpop.f32.mrb[0].mxu0
    %v111 = vadd.f32 0.0, %v110
    %v112 = vpop.f32.mrb[0].mxu0
    %113 = vmatprep.mubr.f32.mxu0 0.0
    %v114 = vand.u32 %v35, 4294901760
    %v115 = vsub.f32 %v35, %v114
    %v116 = vand.u32 %v115, 4294901760
    %v117 = vsub.f32 %v115, %v116
    %v118 = vand.u32 %v117, 4294901760
    %119 = vmatmul.mubr.f32.gmra.mrb[0].mxu0 %v118
    %v120 = vpop.f32.mrb[0].mxu0
    %v121 = vadd.f32 0.0, %v120
    %v122 = vpop.f32.mrb[0].mxu0
    %123 = vdwg.mxu0
    %124 = vmatprep.subr.mxu0 0.0
    %v125 = vand.u32 %v28, 4294901760
    %v126 = vsub.f32 %v28, %v125
    %v127 = vand.u32 %v126, 4294901760
    %v128 = vsub.f32 %v126, %v127
    %v129 = vand.u32 %v128, 4294901760
    %130 = vmatpush1.msra.mxu0 %v129
    %131 = vmatprep.subr.mxu0 0.0
    %v132 = vand.u32 %v29, 4294901760
    %v133 = vsub.f32 %v29, %v132
    %v134 = vand.u32 %v133, 4294901760
    %v135 = vsub.f32 %v133, %v134
    %v136 = vand.u32 %v135, 4294901760
    %137 = vmatpush1.msra.mxu0 %v136
    %138 = vmatprep.subr.mxu0 0.0
    %139 = vmatpush1.msra.mxu0 0.0
    %140 = vmatprep.subr.mxu0 0.0
    %141 = vmatpush1.msra.mxu0 0.0
    %142 = vmatprep.subr.mxu0 0.0
    %143 = vmatpush1.msra.mxu0 0.0
    %144 = vmatprep.subr.mxu0 0.0
    %145 = vmatpush1.msra.mxu0 0.0
    %146 = vmatprep.subr.mxu0 0.0
    %147 = vmatpush1.msra.mxu0 0.0
    %148 = vmatprep.subr.mxu0 0.0
    %149 = vmatpush1.msra.mxu0 0.0
    %150 = vmatprep.subr.mxu0 0.0
    %151 = vmatpush1.msra.mxu0 0.0
    %152 = vmatprep.subr.mxu0 0.0
    %153 = vmatpush1.msra.mxu0 0.0
    %154 = vmatprep.subr.mxu0 0.0
    %155 = vmatpush1.msra.mxu0 0.0
    %156 = vmatprep.subr.mxu0 0.0
    %157 = vmatpush1.msra.mxu0 0.0
    %158 = vmatprep.subr.mxu0 0.0
    %159 = vmatpush1.msra.mxu0 0.0
    %160 = vmatprep.subr.mxu0 0.0
    %161 = vmatpush1.msra.mxu0 0.0
    %162 = vmatprep.subr.mxu0 0.0
    %163 = vmatpush1.msra.mxu0 0.0
    %164 = vmatprep.subr.mxu0 0.0
    %165 = vmatpush1.msra.mxu0 0.0
    %166 = vmatprep.subr.mxu0 0.0
    %167 = vmatpush1.msra.mxu0 0.0
    %168 = vmatprep.subr.mxu0 0.0
    %169 = vmatpush1.msra.mxu0 0.0
    %170 = vmatprep.subr.mxu0 0.0
    %171 = vmatpush1.msra.mxu0 0.0
    %172 = vmatprep.subr.mxu0 0.0
    %173 = vmatpush1.msra.mxu0 0.0
    %174 = vmatprep.subr.mxu0 0.0
    %175 = vmatpush1.msra.mxu0 0.0
    %176 = vmatprep.subr.mxu0 0.0
    %177 = vmatpush1.msra.mxu0 0.0
    %178 = vmatprep.subr.mxu0 0.0
    %179 = vmatpush1.msra.mxu0 0.0
    %180 = vmatprep.subr.mxu0 0.0
    %181 = vmatpush1.msra.mxu0 0.0
    %182 = vmatprep.subr.mxu0 0.0
    %183 = vmatpush1.msra.mxu0 0.0
    %184 = vmatprep.subr.mxu0 0.0
    %185 = vmatpush1.msra.mxu0 0.0
    %186 = vmatprep.subr.mxu0 0.0
    %187 = vmatpush1.msra.mxu0 0.0
    %188 = vmatprep.subr.mxu0 0.0
    %189 = vmatpush1.msra.mxu0 0.0
    %190 = vmatprep.subr.mxu0 0.0
    %191 = vmatpush1.msra.mxu0 0.0
    %192 = vmatprep.subr.mxu0 0.0
    %193 = vmatpush1.msra.mxu0 0.0
    %194 = vmatprep.subr.mxu0 0.0
    %195 = vmatpush1.msra.mxu0 0.0
    %196 = vmatprep.subr.mxu0 0.0
    %197 = vmatpush1.msra.mxu0 0.0
    %198 = vmatprep.mubr.f32.mxu0 0.0
    %v199 = vand.u32 %v32, 4294901760
    %200 = vmatmul.mubr.f32.gmra.mrb[0].mxu0 %v199
    %v201 = vpop.f32.mrb[0].mxu0
    %v202 = vadd.f32 %v111, %v201
    %v203 = vpop.f32.mrb[0].mxu0
    %204 = vmatprep.mubr.f32.mxu0 0.0
    %v205 = vand.u32 %v35, 4294901760
    %206 = vmatmul.mubr.f32.gmra.mrb[0].mxu0 %v205
    %v207 = vpop.f32.mrb[0].mxu0
    %v208 = vadd.f32 %v121, %v207
    %v209 = vpop.f32.mrb[0].mxu0
    %210 = vdwg.mxu0
    %211 = vmatprep.subr.mxu0 0.0
    %v212 = vand.u32 %v28, 4294901760
    %v213 = vsub.f32 %v28, %v212
    %214 = vmatpush1.msra.mxu0 %v213
    %215 = vmatprep.subr.mxu0 0.0
    %v216 = vand.u32 %v29, 4294901760
    %v217 = vsub.f32 %v29, %v216
    %218 = vmatpush1.msra.mxu0 %v217
    %219 = vmatprep.subr.mxu0 0.0
    %220 = vmatpush1.msra.mxu0 0.0
    %221 = vmatprep.subr.mxu0 0.0
    %222 = vmatpush1.msra.mxu0 0.0
    %223 = vmatprep.subr.mxu0 0.0
    %224 = vmatpush1.msra.mxu0 0.0
    %225 = vmatprep.subr.mxu0 0.0
    %226 = vmatpush1.msra.mxu0 0.0
    %227 = vmatprep.subr.mxu0 0.0
    %228 = vmatpush1.msra.mxu0 0.0
    %229 = vmatprep.subr.mxu0 0.0
    %230 = vmatpush1.msra.mxu0 0.0
    %231 = vmatprep.subr.mxu0 0.0
    %232 = vmatpush1.msra.mxu0 0.0
    %233 = vmatprep.subr.mxu0 0.0
    %234 = vmatpush1.msra.mxu0 0.0
    %235 = vmatprep.subr.mxu0 0.0
    %236 = vmatpush1.msra.mxu0 0.0
    %237 = vmatprep.subr.mxu0 0.0
    %238 = vmatpush1.msra.mxu0 0.0
    %239 = vmatprep.subr.mxu0 0.0
    %240 = vmatpush1.msra.mxu0 0.0
    %241 = vmatprep.subr.mxu0 0.0
    %242 = vmatpush1.msra.mxu0 0.0
    %243 = vmatprep.subr.mxu0 0.0
    %244 = vmatpush1.msra.mxu0 0.0
    %245 = vmatprep.subr.mxu0 0.0
    %246 = vmatpush1.msra.mxu0 0.0
    %247 = vmatprep.subr.mxu0 0.0
    %248 = vmatpush1.msra.mxu0 0.0
    %249 = vmatprep.subr.mxu0 0.0
    %250 = vmatpush1.msra.mxu0 0.0
    %251 = vmatprep.subr.mxu0 0.0
    %252 = vmatpush1.msra.mxu0 0.0
    %253 = vmatprep.subr.mxu0 0.0
    %254 = vmatpush1.msra.mxu0 0.0
    %255 = vmatprep.subr.mxu0 0.0
    %256 = vmatpush1.msra.mxu0 0.0
    %257 = vmatprep.subr.mxu0 0.0
    %258 = vmatpush1.msra.mxu0 0.0
    %259 = vmatprep.subr.mxu0 0.0
    %260 = vmatpush1.msra.mxu0 0.0
    %261 = vmatprep.subr.mxu0 0.0
    %262 = vmatpush1.msra.mxu0 0.0
    %263 = vmatprep.subr.mxu0 0.0
    %264 = vmatpush1.msra.mxu0 0.0
    %265 = vmatprep.subr.mxu0 0.0
    %266 = vmatpush1.msra.mxu0 0.0
    %267 = vmatprep.subr.mxu0 0.0
    %268 = vmatpush1.msra.mxu0 0.0
    %269 = vmatprep.subr.mxu0 0.0
    %270 = vmatpush1.msra.mxu0 0.0
    %271 = vmatprep.subr.mxu0 0.0
    %272 = vmatpush1.msra.mxu0 0.0
    %273 = vmatprep.subr.mxu0 0.0
    %274 = vmatpush1.msra.mxu0 0.0
    %275 = vmatprep.subr.mxu0 0.0
    %276 = vmatpush1.msra.mxu0 0.0
    %277 = vmatprep.subr.mxu0 0.0
    %278 = vmatpush1.msra.mxu0 0.0
    %279 = vmatprep.mubr.f32.mxu0 0.0
    %v280 = vand.u32 %v32, 4294901760
    %v281 = vsub.f32 %v32, %v280
    %282 = vmatmul.mubr.f32.gmra.mrb[0].mxu0 %v281
    %v283 = vpop.f32.mrb[0].mxu0
    %v284 = vadd.f32 %v202, %v283
    %v285 = vpop.f32.mrb[0].mxu0
    %286 = vmatprep.mubr.f32.mxu0 0.0
    %v287 = vand.u32 %v35, 4294901760
    %v288 = vsub.f32 %v35, %v287
    %289 = vmatmul.mubr.f32.gmra.mrb[0].mxu0 %v288
    %v290 = vpop.f32.mrb[0].mxu0
    %v291 = vadd.f32 %v208, %v290
    %v292 = vpop.f32.mrb[0].mxu0
    %293 = vdwg.mxu0
    %294 = vmatprep.subr.mxu0 0.0
    %v295 = vand.u32 %v28, 4294901760
    %296 = vmatpush1.msra.mxu0 %v295
    %297 = vmatprep.subr.mxu0 0.0
    %v298 = vand.u32 %v29, 4294901760
    %299 = vmatpush1.msra.mxu0 %v298
    %300 = vmatprep.subr.mxu0 0.0
    %301 = vmatpush1.msra.mxu0 0.0
    %302 = vmatprep.subr.mxu0 0.0
    %303 = vmatpush1.msra.mxu0 0.0
    %304 = vmatprep.subr.mxu0 0.0
    %305 = vmatpush1.msra.mxu0 0.0
    %306 = vmatprep.subr.mxu0 0.0
    %307 = vmatpush1.msra.mxu0 0.0
    %308 = vmatprep.subr.mxu0 0.0
    %309 = vmatpush1.msra.mxu0 0.0
    %310 = vmatprep.subr.mxu0 0.0
    %311 = vmatpush1.msra.mxu0 0.0
    %312 = vmatprep.subr.mxu0 0.0
    %313 = vmatpush1.msra.mxu0 0.0
    %314 = vmatprep.subr.mxu0 0.0
    %315 = vmatpush1.msra.mxu0 0.0
    %316 = vmatprep.subr.mxu0 0.0
    %317 = vmatpush1.msra.mxu0 0.0
    %318 = vmatprep.subr.mxu0 0.0
    %319 = vmatpush1.msra.mxu0 0.0
    %320 = vmatprep.subr.mxu0 0.0
    %321 = vmatpush1.msra.mxu0 0.0
    %322 = vmatprep.subr.mxu0 0.0
    %323 = vmatpush1.msra.mxu0 0.0
    %324 = vmatprep.subr.mxu0 0.0
    %325 = vmatpush1.msra.mxu0 0.0
    %326 = vmatprep.subr.mxu0 0.0
    %327 = vmatpush1.msra.mxu0 0.0
    %328 = vmatprep.subr.mxu0 0.0
    %329 = vmatpush1.msra.mxu0 0.0
    %330 = vmatprep.subr.mxu0 0.0
    %331 = vmatpush1.msra.mxu0 0.0
    %332 = vmatprep.subr.mxu0 0.0
    %333 = vmatpush1.msra.mxu0 0.0
    %334 = vmatprep.subr.mxu0 0.0
    %335 = vmatpush1.msra.mxu0 0.0
    %336 = vmatprep.subr.mxu0 0.0
    %337 = vmatpush1.msra.mxu0 0.0
    %338 = vmatprep.subr.mxu0 0.0
    %339 = vmatpush1.msra.mxu0 0.0
    %340 = vmatprep.subr.mxu0 0.0
    %341 = vmatpush1.msra.mxu0 0.0
    %342 = vmatprep.subr.mxu0 0.0
    %343 = vmatpush1.msra.mxu0 0.0
    %344 = vmatprep.subr.mxu0 0.0
    %345 = vmatpush1.msra.mxu0 0.0
    %346 = vmatprep.subr.mxu0 0.0
    %347 = vmatpush1.msra.mxu0 0.0
    %348 = vmatprep.subr.mxu0 0.0
    %349 = vmatpush1.msra.mxu0 0.0
    %350 = vmatprep.subr.mxu0 0.0
    %351 = vmatpush1.msra.mxu0 0.0
    %352 = vmatprep.subr.mxu0 0.0
    %353 = vmatpush1.msra.mxu0 0.0
    %354 = vmatprep.subr.mxu0 0.0
    %355 = vmatpush1.msra.mxu0 0.0
    %356 = vmatprep.subr.mxu0 0.0
    %357 = vmatpush1.msra.mxu0 0.0
    %358 = vmatprep.subr.mxu0 0.0
    %359 = vmatpush1.msra.mxu0 0.0
    %360 = vmatprep.mubr.f32.mxu0 0.0
    %v361 = vand.u32 %v32, 4294901760
    %v362 = vsub.f32 %v32, %v361
    %v363 = vand.u32 %v362, 4294901760
    %364 = vmatmul.mubr.f32.gmra.mrb[0].mxu0 %v363
    %v365 = vpop.f32.mrb[0].mxu0
    %v366 = vadd.f32 %v284, %v365
    %v367 = vpop.f32.mrb[0].mxu0
    %368 = vmatprep.mubr.f32.mxu0 0.0
    %v369 = vand.u32 %v35, 4294901760
    %v370 = vsub.f32 %v35, %v369
    %v371 = vand.u32 %v370, 4294901760
    %372 = vmatmul.mubr.f32.gmra.mrb[0].mxu0 %v371
    %v373 = vpop.f32.mrb[0].mxu0
    %v374 = vadd.f32 %v291, %v373
    %v375 = vpop.f32.mrb[0].mxu0
    %376 = vdwg.mxu0
    %377 = vmatprep.subr.mxu0 0.0
    %v378 = vand.u32 %v28, 4294901760
    %v379 = vsub.f32 %v28, %v378
    %v380 = vand.u32 %v379, 4294901760
    %381 = vmatpush1.msra.mxu0 %v380
    %382 = vmatprep.subr.mxu0 0.0
    %v383 = vand.u32 %v29, 4294901760
    %v384 = vsub.f32 %v29, %v383
    %v385 = vand.u32 %v384, 4294901760
    %386 = vmatpush1.msra.mxu0 %v385
    %387 = vmatprep.subr.mxu0 0.0
    %388 = vmatpush1.msra.mxu0 0.0
    %389 = vmatprep.subr.mxu0 0.0
    %390 = vmatpush1.msra.mxu0 0.0
    %391 = vmatprep.subr.mxu0 0.0
    %392 = vmatpush1.msra.mxu0 0.0
    %393 = vmatprep.subr.mxu0 0.0
    %394 = vmatpush1.msra.mxu0 0.0
    %395 = vmatprep.subr.mxu0 0.0
    %396 = vmatpush1.msra.mxu0 0.0
    %397 = vmatprep.subr.mxu0 0.0
    %398 = vmatpush1.msra.mxu0 0.0
    %399 = vmatprep.subr.mxu0 0.0
    %400 = vmatpush1.msra.mxu0 0.0
    %401 = vmatprep.subr.mxu0 0.0
    %402 = vmatpush1.msra.mxu0 0.0
    %403 = vmatprep.subr.mxu0 0.0
    %404 = vmatpush1.msra.mxu0 0.0
    %405 = vmatprep.subr.mxu0 0.0
    %406 = vmatpush1.msra.mxu0 0.0
    %407 = vmatprep.subr.mxu0 0.0
    %408 = vmatpush1.msra.mxu0 0.0
    %409 = vmatprep.subr.mxu0 0.0
    %410 = vmatpush1.msra.mxu0 0.0
    %411 = vmatprep.subr.mxu0 0.0
    %412 = vmatpush1.msra.mxu0 0.0
    %413 = vmatprep.subr.mxu0 0.0
    %414 = vmatpush1.msra.mxu0 0.0
    %415 = vmatprep.subr.mxu0 0.0
    %416 = vmatpush1.msra.mxu0 0.0
    %417 = vmatprep.subr.mxu0 0.0
    %418 = vmatpush1.msra.mxu0 0.0
    %419 = vmatprep.subr.mxu0 0.0
    %420 = vmatpush1.msra.mxu0 0.0
    %421 = vmatprep.subr.mxu0 0.0
    %422 = vmatpush1.msra.mxu0 0.0
    %423 = vmatprep.subr.mxu0 0.0
    %424 = vmatpush1.msra.mxu0 0.0
    %425 = vmatprep.subr.mxu0 0.0
    %426 = vmatpush1.msra.mxu0 0.0
    %427 = vmatprep.subr.mxu0 0.0
    %428 = vmatpush1.msra.mxu0 0.0
    %429 = vmatprep.subr.mxu0 0.0
    %430 = vmatpush1.msra.mxu0 0.0
    %431 = vmatprep.subr.mxu0 0.0
    %432 = vmatpush1.msra.mxu0 0.0
    %433 = vmatprep.subr.mxu0 0.0
    %434 = vmatpush1.msra.mxu0 0.0
    %435 = vmatprep.subr.mxu0 0.0
    %436 = vmatpush1.msra.mxu0 0.0
    %437 = vmatprep.subr.mxu0 0.0
    %438 = vmatpush1.msra.mxu0 0.0
    %439 = vmatprep.subr.mxu0 0.0
    %440 = vmatpush1.msra.mxu0 0.0
    %441 = vmatprep.subr.mxu0 0.0
    %442 = vmatpush1.msra.mxu0 0.0
    %443 = vmatprep.subr.mxu0 0.0
    %444 = vmatpush1.msra.mxu0 0.0
    %445 = vmatprep.subr.mxu0 0.0
    %446 = vmatpush1.msra.mxu0 0.0
    %447 = vmatprep.mubr.f32.mxu0 0.0
    %v448 = vand.u32 %v32, 4294901760
    %449 = vmatmul.mubr.f32.gmra.mrb[0].mxu0 %v448
    %v450 = vpop.f32.mrb[0].mxu0
    %v451 = vadd.f32 %v366, %v450
    %v452 = vpop.f32.mrb[0].mxu0
    %453 = vmatprep.mubr.f32.mxu0 0.0
    %v454 = vand.u32 %v35, 4294901760
    %455 = vmatmul.mubr.f32.gmra.mrb[0].mxu0 %v454
    %v456 = vpop.f32.mrb[0].mxu0
    %v457 = vadd.f32 %v374, %v456
    %v458 = vpop.f32.mrb[0].mxu0
    %459 = vdwg.mxu0
    %460 = vmatprep.subr.mxu0 0.0
    %v461 = vand.u32 %v28, 4294901760
    %462 = vmatpush1.msra.mxu0 %v461
    %463 = vmatprep.subr.mxu0 0.0
    %v464 = vand.u32 %v29, 4294901760
    %465 = vmatpush1.msra.mxu0 %v464
    %466 = vmatprep.subr.mxu0 0.0
    %467 = vmatpush1.msra.mxu0 0.0
    %468 = vmatprep.subr.mxu0 0.0
    %469 = vmatpush1.msra.mxu0 0.0
    %470 = vmatprep.subr.mxu0 0.0
    %471 = vmatpush1.msra.mxu0 0.0
    %472 = vmatprep.subr.mxu0 0.0
    %473 = vmatpush1.msra.mxu0 0.0
    %474 = vmatprep.subr.mxu0 0.0
    %475 = vmatpush1.msra.mxu0 0.0
    %476 = vmatprep.subr.mxu0 0.0
    %477 = vmatpush1.msra.mxu0 0.0
    %478 = vmatprep.subr.mxu0 0.0
    %479 = vmatpush1.msra.mxu0 0.0
    %480 = vmatprep.subr.mxu0 0.0
    %481 = vmatpush1.msra.mxu0 0.0
    %482 = vmatprep.subr.mxu0 0.0
    %483 = vmatpush1.msra.mxu0 0.0
    %484 = vmatprep.subr.mxu0 0.0
    %485 = vmatpush1.msra.mxu0 0.0
    %486 = vmatprep.subr.mxu0 0.0
    %487 = vmatpush1.msra.mxu0 0.0
    %488 = vmatprep.subr.mxu0 0.0
    %489 = vmatpush1.msra.mxu0 0.0
    %490 = vmatprep.subr.mxu0 0.0
    %491 = vmatpush1.msra.mxu0 0.0
    %492 = vmatprep.subr.mxu0 0.0
    %493 = vmatpush1.msra.mxu0 0.0
    %494 = vmatprep.subr.mxu0 0.0
    %495 = vmatpush1.msra.mxu0 0.0
    %496 = vmatprep.subr.mxu0 0.0
    %497 = vmatpush1.msra.mxu0 0.0
    %498 = vmatprep.subr.mxu0 0.0
    %499 = vmatpush1.msra.mxu0 0.0
    %500 = vmatprep.subr.mxu0 0.0
    %501 = vmatpush1.msra.mxu0 0.0
    %502 = vmatprep.subr.mxu0 0.0
    %503 = vmatpush1.msra.mxu0 0.0
    %504 = vmatprep.subr.mxu0 0.0
    %505 = vmatpush1.msra.mxu0 0.0
    %506 = vmatprep.subr.mxu0 0.0
    %507 = vmatpush1.msra.mxu0 0.0
    %508 = vmatprep.subr.mxu0 0.0
    %509 = vmatpush1.msra.mxu0 0.0
    %510 = vmatprep.subr.mxu0 0.0
    %511 = vmatpush1.msra.mxu0 0.0
    %512 = vmatprep.subr.mxu0 0.0
    %513 = vmatpush1.msra.mxu0 0.0
    %514 = vmatprep.subr.mxu0 0.0
    %515 = vmatpush1.msra.mxu0 0.0
    %516 = vmatprep.subr.mxu0 0.0
    %517 = vmatpush1.msra.mxu0 0.0
    %518 = vmatprep.subr.mxu0 0.0
    %519 = vmatpush1.msra.mxu0 0.0
    %520 = vmatprep.subr.mxu0 0.0
    %521 = vmatpush1.msra.mxu0 0.0
    %522 = vmatprep.subr.mxu0 0.0
    %523 = vmatpush1.msra.mxu0 0.0
    %524 = vmatprep.subr.mxu0 0.0
    %525 = vmatpush1.msra.mxu0 0.0
    %526 = vmatprep.mubr.f32.mxu0 0.0
    %v527 = vand.u32 %v32, 4294901760
    %528 = vmatmul.mubr.f32.gmra.mrb[0].mxu0 %v527
    %v529 = vpop.f32.mrb[0].mxu0
    %v530 = vadd.f32 %v451, %v529
    %v531 = vpop.f32.mrb[0].mxu0
    %532 = vmatprep.mubr.f32.mxu0 0.0
    %v533 = vand.u32 %v35, 4294901760
    %534 = vmatmul.mubr.f32.gmra.mrb[0].mxu0 %v533
    %v535 = vpop.f32.mrb[0].mxu0
    %v536 = vadd.f32 %v457, %v535
    %v537 = vpop.f32.mrb[0].mxu0
    %538 = vdwg.mxu0
    %v539 = vld [vmem:[%s3] sm:$0xff]
    %v540 = vld [vmem:[%s3 + $0x8] sm:$0xff]
    %v541 = vld [vmem:[%s4] sm:$0xff]
    %v542 = vld [vmem:[%s4 + $0x8] sm:$0xff]
    %543 = vmatprep.subr.mxu0 0.0
    %v544 = vand.u32 %v541, 4294901760
    %545 = vmatpush1.msra.mxu0 %v544
    %546 = vmatprep.subr.mxu0 0.0
    %v547 = vand.u32 %v542, 4294901760
    %548 = vmatpush1.msra.mxu0 %v547
    %549 = vmatprep.subr.mxu0 0.0
    %550 = vmatpush1.msra.mxu0 0.0
    %551 = vmatprep.subr.mxu0 0.0
    %552 = vmatpush1.msra.mxu0 0.0
    %553 = vmatprep.subr.mxu0 0.0
    %554 = vmatpush1.msra.mxu0 0.0
    %555 = vmatprep.subr.mxu0 0.0
    %556 = vmatpush1.msra.mxu0 0.0
    %557 = vmatprep.subr.mxu0 0.0
    %558 = vmatpush1.msra.mxu0 0.0
    %559 = vmatprep.subr.mxu0 0.0
    %560 = vmatpush1.msra.mxu0 0.0
    %561 = vmatprep.subr.mxu0 0.0
    %562 = vmatpush1.msra.mxu0 0.0
    %563 = vmatprep.subr.mxu0 0.0
    %564 = vmatpush1.msra.mxu0 0.0
    %565 = vmatprep.subr.mxu0 0.0
    %566 = vmatpush1.msra.mxu0 0.0
    %567 = vmatprep.subr.mxu0 0.0
    %568 = vmatpush1.msra.mxu0 0.0
    %569 = vmatprep.subr.mxu0 0.0
    %570 = vmatpush1.msra.mxu0 0.0
    %571 = vmatprep.subr.mxu0 0.0
    %572 = vmatpush1.msra.mxu0 0.0
    %573 = vmatprep.subr.mxu0 0.0
    %574 = vmatpush1.msra.mxu0 0.0
    %575 = vmatprep.subr.mxu0 0.0
    %576 = vmatpush1.msra.mxu0 0.0
    %577 = vmatprep.subr.mxu0 0.0
    %578 = vmatpush1.msra.mxu0 0.0
    %579 = vmatprep.subr.mxu0 0.0
    %580 = vmatpush1.msra.mxu0 0.0
    %581 = vmatprep.subr.mxu0 0.0
    %582 = vmatpush1.msra.mxu0 0.0
    %583 = vmatprep.subr.mxu0 0.0
    %584 = vmatpush1.msra.mxu0 0.0
    %585 = vmatprep.subr.mxu0 0.0
    %586 = vmatpush1.msra.mxu0 0.0
    %587 = vmatprep.subr.mxu0 0.0
    %588 = vmatpush1.msra.mxu0 0.0
    %589 = vmatprep.subr.mxu0 0.0
    %590 = vmatpush1.msra.mxu0 0.0
    %591 = vmatprep.subr.mxu0 0.0
    %592 = vmatpush1.msra.mxu0 0.0
    %593 = vmatprep.subr.mxu0 0.0
    %594 = vmatpush1.msra.mxu0 0.0
    %595 = vmatprep.subr.mxu0 0.0
    %596 = vmatpush1.msra.mxu0 0.0
    %597 = vmatprep.subr.mxu0 0.0
    %598 = vmatpush1.msra.mxu0 0.0
    %599 = vmatprep.subr.mxu0 0.0
    %600 = vmatpush1.msra.mxu0 0.0
    %601 = vmatprep.subr.mxu0 0.0
    %602 = vmatpush1.msra.mxu0 0.0
    %603 = vmatprep.subr.mxu0 0.0
    %604 = vmatpush1.msra.mxu0 0.0
    %605 = vmatprep.subr.mxu0 0.0
    %606 = vmatpush1.msra.mxu0 0.0
    %607 = vmatprep.subr.mxu0 0.0
    %608 = vmatpush1.msra.mxu0 0.0
    %609 = vmatprep.mubr.f32.mxu0 0.0
    %v610 = vand.u32 %v32, 4294901760
    %v611 = vsub.f32 %v32, %v610
    %v612 = vand.u32 %v611, 4294901760
    %v613 = vsub.f32 %v611, %v612
    %v614 = vand.u32 %v613, 4294901760
    %615 = vmatmul.mubr.f32.gmra.mrb[0].mxu0 %v614
    %v616 = vpop.f32.mrb[0].mxu0
    %v617 = vadd.f32 0.0, %v616
    %v618 = vpop.f32.mrb[0].mxu0
    %619 = vmatprep.mubr.f32.mxu0 0.0
    %v620 = vand.u32 %v35, 4294901760
    %v621 = vsub.f32 %v35, %v620
    %v622 = vand.u32 %v621, 4294901760
    %v623 = vsub.f32 %v621, %v622
    %v624 = vand.u32 %v623, 4294901760
    %625 = vmatmul.mubr.f32.gmra.mrb[0].mxu0 %v624
    %v626 = vpop.f32.mrb[0].mxu0
    %v627 = vadd.f32 0.0, %v626
    %v628 = vpop.f32.mrb[0].mxu0
    %629 = vdwg.mxu0
    %630 = vmatprep.subr.mxu0 0.0
    %v631 = vand.u32 %v541, 4294901760
    %v632 = vsub.f32 %v541, %v631
    %v633 = vand.u32 %v632, 4294901760
    %v634 = vsub.f32 %v632, %v633
    %v635 = vand.u32 %v634, 4294901760
    %636 = vmatpush1.msra.mxu0 %v635
    %637 = vmatprep.subr.mxu0 0.0
    %v638 = vand.u32 %v542, 4294901760
    %v639 = vsub.f32 %v542, %v638
    %v640 = vand.u32 %v639, 4294901760
    %v641 = vsub.f32 %v639, %v640
    %v642 = vand.u32 %v641, 4294901760
    %643 = vmatpush1.msra.mxu0 %v642
    %644 = vmatprep.subr.mxu0 0.0
    %645 = vmatpush1.msra.mxu0 0.0
    %646 = vmatprep.subr.mxu0 0.0
    %647 = vmatpush1.msra.mxu0 0.0
    %648 = vmatprep.subr.mxu0 0.0
    %649 = vmatpush1.msra.mxu0 0.0
    %650 = vmatprep.subr.mxu0 0.0
    %651 = vmatpush1.msra.mxu0 0.0
    %652 = vmatprep.subr.mxu0 0.0
    %653 = vmatpush1.msra.mxu0 0.0
    %654 = vmatprep.subr.mxu0 0.0
    %655 = vmatpush1.msra.mxu0 0.0
    %656 = vmatprep.subr.mxu0 0.0
    %657 = vmatpush1.msra.mxu0 0.0
    %658 = vmatprep.subr.mxu0 0.0
    %659 = vmatpush1.msra.mxu0 0.0
    %660 = vmatprep.subr.mxu0 0.0
    %661 = vmatpush1.msra.mxu0 0.0
    %662 = vmatprep.subr.mxu0 0.0
    %663 = vmatpush1.msra.mxu0 0.0
    %664 = vmatprep.subr.mxu0 0.0
    %665 = vmatpush1.msra.mxu0 0.0
    %666 = vmatprep.subr.mxu0 0.0
    %667 = vmatpush1.msra.mxu0 0.0
    %668 = vmatprep.subr.mxu0 0.0
    %669 = vmatpush1.msra.mxu0 0.0
    %670 = vmatprep.subr.mxu0 0.0
    %671 = vmatpush1.msra.mxu0 0.0
    %672 = vmatprep.subr.mxu0 0.0
    %673 = vmatpush1.msra.mxu0 0.0
    %674 = vmatprep.subr.mxu0 0.0
    %675 = vmatpush1.msra.mxu0 0.0
    %676 = vmatprep.subr.mxu0 0.0
    %677 = vmatpush1.msra.mxu0 0.0
    %678 = vmatprep.subr.mxu0 0.0
    %679 = vmatpush1.msra.mxu0 0.0
    %680 = vmatprep.subr.mxu0 0.0
    %681 = vmatpush1.msra.mxu0 0.0
    %682 = vmatprep.subr.mxu0 0.0
    %683 = vmatpush1.msra.mxu0 0.0
    %684 = vmatprep.subr.mxu0 0.0
    %685 = vmatpush1.msra.mxu0 0.0
    %686 = vmatprep.subr.mxu0 0.0
    %687 = vmatpush1.msra.mxu0 0.0
    %688 = vmatprep.subr.mxu0 0.0
    %689 = vmatpush1.msra.mxu0 0.0
    %690 = vmatprep.subr.mxu0 0.0
    %691 = vmatpush1.msra.mxu0 0.0
    %692 = vmatprep.subr.mxu0 0.0
    %693 = vmatpush1.msra.mxu0 0.0
    %694 = vmatprep.subr.mxu0 0.0
    %695 = vmatpush1.msra.mxu0 0.0
    %696 = vmatprep.subr.mxu0 0.0
    %697 = vmatpush1.msra.mxu0 0.0
    %698 = vmatprep.subr.mxu0 0.0
    %699 = vmatpush1.msra.mxu0 0.0
    %700 = vmatprep.subr.mxu0 0.0
    %701 = vmatpush1.msra.mxu0 0.0
    %702 = vmatprep.subr.mxu0 0.0
    %703 = vmatpush1.msra.mxu0 0.0
    %704 = vmatprep.mubr.f32.mxu0 0.0
    %v705 = vand.u32 %v32, 4294901760
    %706 = vmatmul.mubr.f32.gmra.mrb[0].mxu0 %v705
    %v707 = vpop.f32.mrb[0].mxu0
    %v708 = vadd.f32 %v617, %v707
    %v709 = vpop.f32.mrb[0].mxu0
    %710 = vmatprep.mubr.f32.mxu0 0.0
    %v711 = vand.u32 %v35, 4294901760
    %712 = vmatmul.mubr.f32.gmra.mrb[0].mxu0 %v711
    %v713 = vpop.f32.mrb[0].mxu0
    %v714 = vadd.f32 %v627, %v713
    %v715 = vpop.f32.mrb[0].mxu0
    %716 = vdwg.mxu0
    %717 = vmatprep.subr.mxu0 0.0
    %v718 = vand.u32 %v541, 4294901760
    %v719 = vsub.f32 %v541, %v718
    %720 = vmatpush1.msra.mxu0 %v719
    %721 = vmatprep.subr.mxu0 0.0
    %v722 = vand.u32 %v542, 4294901760
    %v723 = vsub.f32 %v542, %v722
    %724 = vmatpush1.msra.mxu0 %v723
    %725 = vmatprep.subr.mxu0 0.0
    %726 = vmatpush1.msra.mxu0 0.0
    %727 = vmatprep.subr.mxu0 0.0
    %728 = vmatpush1.msra.mxu0 0.0
    %729 = vmatprep.subr.mxu0 0.0
    %730 = vmatpush1.msra.mxu0 0.0
    %731 = vmatprep.subr.mxu0 0.0
    %732 = vmatpush1.msra.mxu0 0.0
    %733 = vmatprep.subr.mxu0 0.0
    %734 = vmatpush1.msra.mxu0 0.0
    %735 = vmatprep.subr.mxu0 0.0
    %736 = vmatpush1.msra.mxu0 0.0
    %737 = vmatprep.subr.mxu0 0.0
    %738 = vmatpush1.msra.mxu0 0.0
    %739 = vmatprep.subr.mxu0 0.0
    %740 = vmatpush1.msra.mxu0 0.0
    %741 = vmatprep.subr.mxu0 0.0
    %742 = vmatpush1.msra.mxu0 0.0
    %743 = vmatprep.subr.mxu0 0.0
    %744 = vmatpush1.msra.mxu0 0.0
    %745 = vmatprep.subr.mxu0 0.0
    %746 = vmatpush1.msra.mxu0 0.0
    %747 = vmatprep.subr.mxu0 0.0
    %748 = vmatpush1.msra.mxu0 0.0
    %749 = vmatprep.subr.mxu0 0.0
    %750 = vmatpush1.msra.mxu0 0.0
    %751 = vmatprep.subr.mxu0 0.0
    %752 = vmatpush1.msra.mxu0 0.0
    %753 = vmatprep.subr.mxu0 0.0
    %754 = vmatpush1.msra.mxu0 0.0
    %755 = vmatprep.subr.mxu0 0.0
    %756 = vmatpush1.msra.mxu0 0.0
    %757 = vmatprep.subr.mxu0 0.0
    %758 = vmatpush1.msra.mxu0 0.0
    %759 = vmatprep.subr.mxu0 0.0
    %760 = vmatpush1.msra.mxu0 0.0
    %761 = vmatprep.subr.mxu0 0.0
    %762 = vmatpush1.msra.mxu0 0.0
    %763 = vmatprep.subr.mxu0 0.0
    %764 = vmatpush1.msra.mxu0 0.0
    %765 = vmatprep.subr.mxu0 0.0
    %766 = vmatpush1.msra.mxu0 0.0
    %767 = vmatprep.subr.mxu0 0.0
    %768 = vmatpush1.msra.mxu0 0.0
    %769 = vmatprep.subr.mxu0 0.0
    %770 = vmatpush1.msra.mxu0 0.0
    %771 = vmatprep.subr.mxu0 0.0
    %772 = vmatpush1.msra.mxu0 0.0
    %773 = vmatprep.subr.mxu0 0.0
    %774 = vmatpush1.msra.mxu0 0.0
    %775 = vmatprep.subr.mxu0 0.0
    %776 = vmatpush1.msra.mxu0 0.0
    %777 = vmatprep.subr.mxu0 0.0
    %778 = vmatpush1.msra.mxu0 0.0
    %779 = vmatprep.subr.mxu0 0.0
    %780 = vmatpush1.msra.mxu0 0.0
    %781 = vmatprep.subr.mxu0 0.0
    %782 = vmatpush1.msra.mxu0 0.0
    %783 = vmatprep.subr.mxu0 0.0
    %784 = vmatpush1.msra.mxu0 0.0
    %785 = vmatprep.mubr.f32.mxu0 0.0
    %v786 = vand.u32 %v32, 4294901760
    %v787 = vsub.f32 %v32, %v786
    %788 = vmatmul.mubr.f32.gmra.mrb[0].mxu0 %v787
    %v789 = vpop.f32.mrb[0].mxu0
    %v790 = vadd.f32 %v708, %v789
    %v791 = vpop.f32.mrb[0].mxu0
    %792 = vmatprep.mubr.f32.mxu0 0.0
    %v793 = vand.u32 %v35, 4294901760
    %v794 = vsub.f32 %v35, %v793
    %795 = vmatmul.mubr.f32.gmra.mrb[0].mxu0 %v794
    %v796 = vpop.f32.mrb[0].mxu0
    %v797 = vadd.f32 %v714, %v796
    %v798 = vpop.f32.mrb[0].mxu0
    %799 = vdwg.mxu0
    %800 = vmatprep.subr.mxu0 0.0
    %v801 = vand.u32 %v541, 4294901760
    %802 = vmatpush1.msra.mxu0 %v801
    %803 = vmatprep.subr.mxu0 0.0
    %v804 = vand.u32 %v542, 4294901760
    %805 = vmatpush1.msra.mxu0 %v804
    %806 = vmatprep.subr.mxu0 0.0
    %807 = vmatpush1.msra.mxu0 0.0
    %808 = vmatprep.subr.mxu0 0.0
    %809 = vmatpush1.msra.mxu0 0.0
    %810 = vmatprep.subr.mxu0 0.0
    %811 = vmatpush1.msra.mxu0 0.0
    %812 = vmatprep.subr.mxu0 0.0
    %813 = vmatpush1.msra.mxu0 0.0
    %814 = vmatprep.subr.mxu0 0.0
    %815 = vmatpush1.msra.mxu0 0.0
    %816 = vmatprep.subr.mxu0 0.0
    %817 = vmatpush1.msra.mxu0 0.0
    %818 = vmatprep.subr.mxu0 0.0
    %819 = vmatpush1.msra.mxu0 0.0
    %820 = vmatprep.subr.mxu0 0.0
    %821 = vmatpush1.msra.mxu0 0.0
    %822 = vmatprep.subr.mxu0 0.0
    %823 = vmatpush1.msra.mxu0 0.0
    %824 = vmatprep.subr.mxu0 0.0
    %825 = vmatpush1.msra.mxu0 0.0
    %826 = vmatprep.subr.mxu0 0.0
    %827 = vmatpush1.msra.mxu0 0.0
    %828 = vmatprep.subr.mxu0 0.0
    %829 = vmatpush1.msra.mxu0 0.0
    %830 = vmatprep.subr.mxu0 0.0
    %831 = vmatpush1.msra.mxu0 0.0
    %832 = vmatprep.subr.mxu0 0.0
    %833 = vmatpush1.msra.mxu0 0.0
    %834 = vmatprep.subr.mxu0 0.0
    %835 = vmatpush1.msra.mxu0 0.0
    %836 = vmatprep.subr.mxu0 0.0
    %837 = vmatpush1.msra.mxu0 0.0
    %838 = vmatprep.subr.mxu0 0.0
    %839 = vmatpush1.msra.mxu0 0.0
    %840 = vmatprep.subr.mxu0 0.0
    %841 = vmatpush1.msra.mxu0 0.0
    %842 = vmatprep.subr.mxu0 0.0
    %843 = vmatpush1.msra.mxu0 0.0
    %844 = vmatprep.subr.mxu0 0.0
    %845 = vmatpush1.msra.mxu0 0.0
    %846 = vmatprep.subr.mxu0 0.0
    %847 = vmatpush1.msra.mxu0 0.0
    %848 = vmatprep.subr.mxu0 0.0
    %849 = vmatpush1.msra.mxu0 0.0
    %850 = vmatprep.subr.mxu0 0.0
    %851 = vmatpush1.msra.mxu0 0.0
    %852 = vmatprep.subr.mxu0 0.0
    %853 = vmatpush1.msra.mxu0 0.0
    %854 = vmatprep.subr.mxu0 0.0
    %855 = vmatpush1.msra.mxu0 0.0
    %856 = vmatprep.subr.mxu0 0.0
    %857 = vmatpush1.msra.mxu0 0.0
    %858 = vmatprep.subr.mxu0 0.0
    %859 = vmatpush1.msra.mxu0 0.0
    %860 = vmatprep.subr.mxu0 0.0
    %861 = vmatpush1.msra.mxu0 0.0
    %862 = vmatprep.subr.mxu0 0.0
    %863 = vmatpush1.msra.mxu0 0.0
    %864 = vmatprep.subr.mxu0 0.0
    %865 = vmatpush1.msra.mxu0 0.0
    %866 = vmatprep.mubr.f32.mxu0 0.0
    %v867 = vand.u32 %v32, 4294901760
    %v868 = vsub.f32 %v32, %v867
    %v869 = vand.u32 %v868, 4294901760
    %870 = vmatmul.mubr.f32.gmra.mrb[0].mxu0 %v869
    %v871 = vpop.f32.mrb[0].mxu0
    %v872 = vadd.f32 %v790, %v871
    %v873 = vpop.f32.mrb[0].mxu0
    %874 = vmatprep.mubr.f32.mxu0 0.0
    %v875 = vand.u32 %v35, 4294901760
    %v876 = vsub.f32 %v35, %v875
    %v877 = vand.u32 %v876, 4294901760
    %878 = vmatmul.mubr.f32.gmra.mrb[0].mxu0 %v877
    %v879 = vpop.f32.mrb[0].mxu0
    %v880 = vadd.f32 %v797, %v879
    %v881 = vpop.f32.mrb[0].mxu0
    %882 = vdwg.mxu0
    %883 = vmatprep.subr.mxu0 0.0
    %v884 = vand.u32 %v541, 4294901760
    %v885 = vsub.f32 %v541, %v884
    %v886 = vand.u32 %v885, 4294901760
    %887 = vmatpush1.msra.mxu0 %v886
    %888 = vmatprep.subr.mxu0 0.0
    %v889 = vand.u32 %v542, 4294901760
    %v890 = vsub.f32 %v542, %v889
    %v891 = vand.u32 %v890, 4294901760
    %892 = vmatpush1.msra.mxu0 %v891
    %893 = vmatprep.subr.mxu0 0.0
    %894 = vmatpush1.msra.mxu0 0.0
    %895 = vmatprep.subr.mxu0 0.0
    %896 = vmatpush1.msra.mxu0 0.0
    %897 = vmatprep.subr.mxu0 0.0
    %898 = vmatpush1.msra.mxu0 0.0
    %899 = vmatprep.subr.mxu0 0.0
    %900 = vmatpush1.msra.mxu0 0.0
    %901 = vmatprep.subr.mxu0 0.0
    %902 = vmatpush1.msra.mxu0 0.0
    %903 = vmatprep.subr.mxu0 0.0
    %904 = vmatpush1.msra.mxu0 0.0
    %905 = vmatprep.subr.mxu0 0.0
    %906 = vmatpush1.msra.mxu0 0.0
    %907 = vmatprep.subr.mxu0 0.0
    %908 = vmatpush1.msra.mxu0 0.0
    %909 = vmatprep.subr.mxu0 0.0
    %910 = vmatpush1.msra.mxu0 0.0
    %911 = vmatprep.subr.mxu0 0.0
    %912 = vmatpush1.msra.mxu0 0.0
    %913 = vmatprep.subr.mxu0 0.0
    %914 = vmatpush1.msra.mxu0 0.0
    %915 = vmatprep.subr.mxu0 0.0
    %916 = vmatpush1.msra.mxu0 0.0
    %917 = vmatprep.subr.mxu0 0.0
    %918 = vmatpush1.msra.mxu0 0.0
    %919 = vmatprep.subr.mxu0 0.0
    %920 = vmatpush1.msra.mxu0 0.0
    %921 = vmatprep.subr.mxu0 0.0
    %922 = vmatpush1.msra.mxu0 0.0
    %923 = vmatprep.subr.mxu0 0.0
    %924 = vmatpush1.msra.mxu0 0.0
    %925 = vmatprep.subr.mxu0 0.0
    %926 = vmatpush1.msra.mxu0 0.0
    %927 = vmatprep.subr.mxu0 0.0
    %928 = vmatpush1.msra.mxu0 0.0
    %929 = vmatprep.subr.mxu0 0.0
    %930 = vmatpush1.msra.mxu0 0.0
    %931 = vmatprep.subr.mxu0 0.0
    %932 = vmatpush1.msra.mxu0 0.0
    %933 = vmatprep.subr.mxu0 0.0
    %934 = vmatpush1.msra.mxu0 0.0
    %935 = vmatprep.subr.mxu0 0.0
    %936 = vmatpush1.msra.mxu0 0.0
    %937 = vmatprep.subr.mxu0 0.0
    %938 = vmatpush1.msra.mxu0 0.0
    %939 = vmatprep.subr.mxu0 0.0
    %940 = vmatpush1.msra.mxu0 0.0
    %941 = vmatprep.subr.mxu0 0.0
    %942 = vmatpush1.msra.mxu0 0.0
    %943 = vmatprep.subr.mxu0 0.0
    %944 = vmatpush1.msra.mxu0 0.0
    %945 = vmatprep.subr.mxu0 0.0
    %946 = vmatpush1.msra.mxu0 0.0
    %947 = vmatprep.subr.mxu0 0.0
    %948 = vmatpush1.msra.mxu0 0.0
    %949 = vmatprep.subr.mxu0 0.0
    %950 = vmatpush1.msra.mxu0 0.0
    %951 = vmatprep.subr.mxu0 0.0
    %952 = vmatpush1.msra.mxu0 0.0
    %953 = vmatprep.mubr.f32.mxu0 0.0
    %v954 = vand.u32 %v32, 4294901760
    %955 = vmatmul.mubr.f32.gmra.mrb[0].mxu0 %v954
    %v956 = vpop.f32.mrb[0].mxu0
    %v957 = vadd.f32 %v872, %v956
    %v958 = vpop.f32.mrb[0].mxu0
    %959 = vmatprep.mubr.f32.mxu0 0.0
    %v960 = vand.u32 %v35, 4294901760
    %961 = vmatmul.mubr.f32.gmra.mrb[0].mxu0 %v960
    %v962 = vpop.f32.mrb[0].mxu0
    %v963 = vadd.f32 %v880, %v962
    %v964 = vpop.f32.mrb[0].mxu0
    %965 = vdwg.mxu0
    %966 = vmatprep.subr.mxu0 0.0
    %v967 = vand.u32 %v541, 4294901760
    %968 = vmatpush1.msra.mxu0 %v967
    %969 = vmatprep.subr.mxu0 0.0
    %v970 = vand.u32 %v542, 4294901760
    %971 = vmatpush1.msra.mxu0 %v970
    %972 = vmatprep.subr.mxu0 0.0
    %973 = vmatpush1.msra.mxu0 0.0
    %974 = vmatprep.subr.mxu0 0.0
    %975 = vmatpush1.msra.mxu0 0.0
    %976 = vmatprep.subr.mxu0 0.0
    %977 = vmatpush1.msra.mxu0 0.0
    %978 = vmatprep.subr.mxu0 0.0
    %979 = vmatpush1.msra.mxu0 0.0
    %980 = vmatprep.subr.mxu0 0.0
    %981 = vmatpush1.msra.mxu0 0.0
    %982 = vmatprep.subr.mxu0 0.0
    %983 = vmatpush1.msra.mxu0 0.0
    %984 = vmatprep.subr.mxu0 0.0
    %985 = vmatpush1.msra.mxu0 0.0
    %986 = vmatprep.subr.mxu0 0.0
    %987 = vmatpush1.msra.mxu0 0.0
    %988 = vmatprep.subr.mxu0 0.0
    %989 = vmatpush1.msra.mxu0 0.0
    %990 = vmatprep.subr.mxu0 0.0
    %991 = vmatpush1.msra.mxu0 0.0
    %992 = vmatprep.subr.mxu0 0.0
    %993 = vmatpush1.msra.mxu0 0.0
    %994 = vmatprep.subr.mxu0 0.0
    %995 = vmatpush1.msra.mxu0 0.0
    %996 = vmatprep.subr.mxu0 0.0
    %997 = vmatpush1.msra.mxu0 0.0
    %998 = vmatprep.subr.mxu0 0.0
    %999 = vmatpush1.msra.mxu0 0.0
    %1000 = vmatprep.subr.mxu0 0.0
    %1001 = vmatpush1.msra.mxu0 0.0
    %1002 = vmatprep.subr.mxu0 0.0
    %1003 = vmatpush1.msra.mxu0 0.0
    %1004 = vmatprep.subr.mxu0 0.0
    %1005 = vmatpush1.msra.mxu0 0.0
    %1006 = vmatprep.subr.mxu0 0.0
    %1007 = vmatpush1.msra.mxu0 0.0
    %1008 = vmatprep.subr.mxu0 0.0
    %1009 = vmatpush1.msra.mxu0 0.0
    %1010 = vmatprep.subr.mxu0 0.0
    %1011 = vmatpush1.msra.mxu0 0.0
    %1012 = vmatprep.subr.mxu0 0.0
    %1013 = vmatpush1.msra.mxu0 0.0
    %1014 = vmatprep.subr.mxu0 0.0
    %1015 = vmatpush1.msra.mxu0 0.0
    %1016 = vmatprep.subr.mxu0 0.0
    %1017 = vmatpush1.msra.mxu0 0.0
    %1018 = vmatprep.subr.mxu0 0.0
    %1019 = vmatpush1.msra.mxu0 0.0
    %1020 = vmatprep.subr.mxu0 0.0
    %1021 = vmatpush1.msra.mxu0 0.0
    %1022 = vmatprep.subr.mxu0 0.0
    %1023 = vmatpush1.msra.mxu0 0.0
    %1024 = vmatprep.subr.mxu0 0.0
    %1025 = vmatpush1.msra.mxu0 0.0
    %1026 = vmatprep.subr.mxu0 0.0
    %1027 = vmatpush1.msra.mxu0 0.0
    %1028 = vmatprep.subr.mxu0 0.0
    %1029 = vmatpush1.msra.mxu0 0.0
    %1030 = vmatprep.subr.mxu0 0.0
    %1031 = vmatpush1.msra.mxu0 0.0
    %1032 = vmatprep.mubr.f32.mxu0 0.0
    %v1033 = vand.u32 %v32, 4294901760
    %1034 = vmatmul.mubr.f32.gmra.mrb[0].mxu0 %v1033
    %v1035 = vpop.f32.mrb[0].mxu0
    %v1036 = vadd.f32 %v957, %v1035
    %v1037 = vpop.f32.mrb[0].mxu0
    %1038 = vmatprep.mubr.f32.mxu0 0.0
    %v1039 = vand.u32 %v35, 4294901760
    %1040 = vmatmul.mubr.f32.gmra.mrb[0].mxu0 %v1039
    %v1041 = vpop.f32.mrb[0].mxu0
    %v1042 = vadd.f32 %v963, %v1041
    %v1043 = vpop.f32.mrb[0].mxu0
    %1044 = vdwg.mxu0
    %v1046 = vsel %vm30, %v24, 0
    %v1049 = vsel %vm30, %v25, 0
    %1051 = vmatprep.subr.mxu0 0.0
    %v1052 = vand.u32 %v539, 4294901760
    %1053 = vmatpush1.msra.mxu0 %v1052
    %1054 = vmatprep.subr.mxu0 0.0
    %v1055 = vand.u32 %v540, 4294901760
    %1056 = vmatpush1.msra.mxu0 %v1055
    %1057 = vmatprep.subr.mxu0 0.0
    %1058 = vmatpush1.msra.mxu0 0.0
    %1059 = vmatprep.subr.mxu0 0.0
    %1060 = vmatpush1.msra.mxu0 0.0
    %1061 = vmatprep.subr.mxu0 0.0
    %1062 = vmatpush1.msra.mxu0 0.0
    %1063 = vmatprep.subr.mxu0 0.0
    %1064 = vmatpush1.msra.mxu0 0.0
    %1065 = vmatprep.subr.mxu0 0.0
    %1066 = vmatpush1.msra.mxu0 0.0
    %1067 = vmatprep.subr.mxu0 0.0
    %1068 = vmatpush1.msra.mxu0 0.0
    %1069 = vmatprep.subr.mxu0 0.0
    %1070 = vmatpush1.msra.mxu0 0.0
    %1071 = vmatprep.subr.mxu0 0.0
    %1072 = vmatpush1.msra.mxu0 0.0
    %1073 = vmatprep.subr.mxu0 0.0
    %1074 = vmatpush1.msra.mxu0 0.0
    %1075 = vmatprep.subr.mxu0 0.0
    %1076 = vmatpush1.msra.mxu0 0.0
    %1077 = vmatprep.subr.mxu0 0.0
    %1078 = vmatpush1.msra.mxu0 0.0
    %1079 = vmatprep.subr.mxu0 0.0
    %1080 = vmatpush1.msra.mxu0 0.0
    %1081 = vmatprep.subr.mxu0 0.0
    %1082 = vmatpush1.msra.mxu0 0.0
    %1083 = vmatprep.subr.mxu0 0.0
    %1084 = vmatpush1.msra.mxu0 0.0
    %1085 = vmatprep.subr.mxu0 0.0
    %1086 = vmatpush1.msra.mxu0 0.0
    %1087 = vmatprep.subr.mxu0 0.0
    %1088 = vmatpush1.msra.mxu0 0.0
    %1089 = vmatprep.subr.mxu0 0.0
    %1090 = vmatpush1.msra.mxu0 0.0
    %1091 = vmatprep.subr.mxu0 0.0
    %1092 = vmatpush1.msra.mxu0 0.0
    %1093 = vmatprep.subr.mxu0 0.0
    %1094 = vmatpush1.msra.mxu0 0.0
    %1095 = vmatprep.subr.mxu0 0.0
    %1096 = vmatpush1.msra.mxu0 0.0
    %1097 = vmatprep.subr.mxu0 0.0
    %1098 = vmatpush1.msra.mxu0 0.0
    %1099 = vmatprep.subr.mxu0 0.0
    %1100 = vmatpush1.msra.mxu0 0.0
    %1101 = vmatprep.subr.mxu0 0.0
    %1102 = vmatpush1.msra.mxu0 0.0
    %1103 = vmatprep.subr.mxu0 0.0
    %1104 = vmatpush1.msra.mxu0 0.0
    %1105 = vmatprep.subr.mxu0 0.0
    %1106 = vmatpush1.msra.mxu0 0.0
    %1107 = vmatprep.subr.mxu0 0.0
    %1108 = vmatpush1.msra.mxu0 0.0
    %1109 = vmatprep.subr.mxu0 0.0
    %1110 = vmatpush1.msra.mxu0 0.0
    %1111 = vmatprep.subr.mxu0 0.0
    %1112 = vmatpush1.msra.mxu0 0.0
    %1113 = vmatprep.subr.mxu0 0.0
    %1114 = vmatpush1.msra.mxu0 0.0
    %1115 = vmatprep.subr.mxu0 0.0
    %1116 = vmatpush1.msra.mxu0 0.0
    %1117 = vmatprep.mubr.f32.mxu0 0.0
    %v1118 = vand.u32 %v1046, 4294901760
    %v1119 = vsub.f32 %v1046, %v1118
    %v1120 = vand.u32 %v1119, 4294901760
    %v1121 = vsub.f32 %v1119, %v1120
    %v1122 = vand.u32 %v1121, 4294901760
    %1123 = vmatmul.mubr.f32.gmra.mrb[0].mxu0 %v1122
    %v1124 = vpop.f32.mrb[0].mxu0
    %v1125 = vadd.f32 %v1036, %v1124
    %v1126 = vpop.f32.mrb[0].mxu0
    %1127 = vmatprep.mubr.f32.mxu0 0.0
    %v1128 = vand.u32 %v1049, 4294901760
    %v1129 = vsub.f32 %v1049, %v1128
    %v1130 = vand.u32 %v1129, 4294901760
    %v1131 = vsub.f32 %v1129, %v1130
    %v1132 = vand.u32 %v1131, 4294901760
    %1133 = vmatmul.mubr.f32.gmra.mrb[0].mxu0 %v1132
    %v1134 = vpop.f32.mrb[0].mxu0
    %v1135 = vadd.f32 %v1042, %v1134
    %v1136 = vpop.f32.mrb[0].mxu0
    %1137 = vdwg.mxu0
    %1138 = vmatprep.subr.mxu0 0.0
    %v1139 = vand.u32 %v539, 4294901760
    %v1140 = vsub.f32 %v539, %v1139
    %v1141 = vand.u32 %v1140, 4294901760
    %v1142 = vsub.f32 %v1140, %v1141
    %v1143 = vand.u32 %v1142, 4294901760
    %1144 = vmatpush1.msra.mxu0 %v1143
    %1145 = vmatprep.subr.mxu0 0.0
    %v1146 = vand.u32 %v540, 4294901760
    %v1147 = vsub.f32 %v540, %v1146
    %v1148 = vand.u32 %v1147, 4294901760
    %v1149 = vsub.f32 %v1147, %v1148
    %v1150 = vand.u32 %v1149, 4294901760
    %1151 = vmatpush1.msra.mxu0 %v1150
    %1152 = vmatprep.subr.mxu0 0.0
    %1153 = vmatpush1.msra.mxu0 0.0
    %1154 = vmatprep.subr.mxu0 0.0
    %1155 = vmatpush1.msra.mxu0 0.0
    %1156 = vmatprep.subr.mxu0 0.0
    %1157 = vmatpush1.msra.mxu0 0.0
    %1158 = vmatprep.subr.mxu0 0.0
    %1159 = vmatpush1.msra.mxu0 0.0
    %1160 = vmatprep.subr.mxu0 0.0
    %1161 = vmatpush1.msra.mxu0 0.0
    %1162 = vmatprep.subr.mxu0 0.0
    %1163 = vmatpush1.msra.mxu0 0.0
    %1164 = vmatprep.subr.mxu0 0.0
    %1165 = vmatpush1.msra.mxu0 0.0
    %1166 = vmatprep.subr.mxu0 0.0
    %1167 = vmatpush1.msra.mxu0 0.0
    %1168 = vmatprep.subr.mxu0 0.0
    %1169 = vmatpush1.msra.mxu0 0.0
    %1170 = vmatprep.subr.mxu0 0.0
    %1171 = vmatpush1.msra.mxu0 0.0
    %1172 = vmatprep.subr.mxu0 0.0
    %1173 = vmatpush1.msra.mxu0 0.0
    %1174 = vmatprep.subr.mxu0 0.0
    %1175 = vmatpush1.msra.mxu0 0.0
    %1176 = vmatprep.subr.mxu0 0.0
    %1177 = vmatpush1.msra.mxu0 0.0
    %1178 = vmatprep.subr.mxu0 0.0
    %1179 = vmatpush1.msra.mxu0 0.0
    %1180 = vmatprep.subr.mxu0 0.0
    %1181 = vmatpush1.msra.mxu0 0.0
    %1182 = vmatprep.subr.mxu0 0.0
    %1183 = vmatpush1.msra.mxu0 0.0
    %1184 = vmatprep.subr.mxu0 0.0
    %1185 = vmatpush1.msra.mxu0 0.0
    %1186 = vmatprep.subr.mxu0 0.0
    %1187 = vmatpush1.msra.mxu0 0.0
    %1188 = vmatprep.subr.mxu0 0.0
    %1189 = vmatpush1.msra.mxu0 0.0
    %1190 = vmatprep.subr.mxu0 0.0
    %1191 = vmatpush1.msra.mxu0 0.0
    %1192 = vmatprep.subr.mxu0 0.0
    %1193 = vmatpush1.msra.mxu0 0.0
    %1194 = vmatprep.subr.mxu0 0.0
    %1195 = vmatpush1.msra.mxu0 0.0
    %1196 = vmatprep.subr.mxu0 0.0
    %1197 = vmatpush1.msra.mxu0 0.0
    %1198 = vmatprep.subr.mxu0 0.0
    %1199 = vmatpush1.msra.mxu0 0.0
    %1200 = vmatprep.subr.mxu0 0.0
    %1201 = vmatpush1.msra.mxu0 0.0
    %1202 = vmatprep.subr.mxu0 0.0
    %1203 = vmatpush1.msra.mxu0 0.0
    %1204 = vmatprep.subr.mxu0 0.0
    %1205 = vmatpush1.msra.mxu0 0.0
    %1206 = vmatprep.subr.mxu0 0.0
    %1207 = vmatpush1.msra.mxu0 0.0
    %1208 = vmatprep.subr.mxu0 0.0
    %1209 = vmatpush1.msra.mxu0 0.0
    %1210 = vmatprep.subr.mxu0 0.0
    %1211 = vmatpush1.msra.mxu0 0.0
    %1212 = vmatprep.mubr.f32.mxu0 0.0
    %v1213 = vand.u32 %v1046, 4294901760
    %1214 = vmatmul.mubr.f32.gmra.mrb[0].mxu0 %v1213
    %v1215 = vpop.f32.mrb[0].mxu0
    %v1216 = vadd.f32 %v1125, %v1215
    %v1217 = vpop.f32.mrb[0].mxu0
    %1218 = vmatprep.mubr.f32.mxu0 0.0
    %v1219 = vand.u32 %v1049, 4294901760
    %1220 = vmatmul.mubr.f32.gmra.mrb[0].mxu0 %v1219
    %v1221 = vpop.f32.mrb[0].mxu0
    %v1222 = vadd.f32 %v1135, %v1221
    %v1223 = vpop.f32.mrb[0].mxu0
    %1224 = vdwg.mxu0
    %1225 = vmatprep.subr.mxu0 0.0
    %v1226 = vand.u32 %v539, 4294901760
    %v1227 = vsub.f32 %v539, %v1226
    %1228 = vmatpush1.msra.mxu0 %v1227
    %1229 = vmatprep.subr.mxu0 0.0
    %v1230 = vand.u32 %v540, 4294901760
    %v1231 = vsub.f32 %v540, %v1230
    %1232 = vmatpush1.msra.mxu0 %v1231
    %1233 = vmatprep.subr.mxu0 0.0
    %1234 = vmatpush1.msra.mxu0 0.0
    %1235 = vmatprep.subr.mxu0 0.0
    %1236 = vmatpush1.msra.mxu0 0.0
    %1237 = vmatprep.subr.mxu0 0.0
    %1238 = vmatpush1.msra.mxu0 0.0
    %1239 = vmatprep.subr.mxu0 0.0
    %1240 = vmatpush1.msra.mxu0 0.0
    %1241 = vmatprep.subr.mxu0 0.0
    %1242 = vmatpush1.msra.mxu0 0.0
    %1243 = vmatprep.subr.mxu0 0.0
    %1244 = vmatpush1.msra.mxu0 0.0
    %1245 = vmatprep.subr.mxu0 0.0
    %1246 = vmatpush1.msra.mxu0 0.0
    %1247 = vmatprep.subr.mxu0 0.0
    %1248 = vmatpush1.msra.mxu0 0.0
    %1249 = vmatprep.subr.mxu0 0.0
    %1250 = vmatpush1.msra.mxu0 0.0
    %1251 = vmatprep.subr.mxu0 0.0
    %1252 = vmatpush1.msra.mxu0 0.0
    %1253 = vmatprep.subr.mxu0 0.0
    %1254 = vmatpush1.msra.mxu0 0.0
    %1255 = vmatprep.subr.mxu0 0.0
    %1256 = vmatpush1.msra.mxu0 0.0
    %1257 = vmatprep.subr.mxu0 0.0
    %1258 = vmatpush1.msra.mxu0 0.0
    %1259 = vmatprep.subr.mxu0 0.0
    %1260 = vmatpush1.msra.mxu0 0.0
    %1261 = vmatprep.subr.mxu0 0.0
    %1262 = vmatpush1.msra.mxu0 0.0
    %1263 = vmatprep.subr.mxu0 0.0
    %1264 = vmatpush1.msra.mxu0 0.0
    %1265 = vmatprep.subr.mxu0 0.0
    %1266 = vmatpush1.msra.mxu0 0.0
    %1267 = vmatprep.subr.mxu0 0.0
    %1268 = vmatpush1.msra.mxu0 0.0
    %1269 = vmatprep.subr.mxu0 0.0
    %1270 = vmatpush1.msra.mxu0 0.0
    %1271 = vmatprep.subr.mxu0 0.0
    %1272 = vmatpush1.msra.mxu0 0.0
    %1273 = vmatprep.subr.mxu0 0.0
    %1274 = vmatpush1.msra.mxu0 0.0
    %1275 = vmatprep.subr.mxu0 0.0
    %1276 = vmatpush1.msra.mxu0 0.0
    %1277 = vmatprep.subr.mxu0 0.0
    %1278 = vmatpush1.msra.mxu0 0.0
    %1279 = vmatprep.subr.mxu0 0.0
    %1280 = vmatpush1.msra.mxu0 0.0
    %1281 = vmatprep.subr.mxu0 0.0
    %1282 = vmatpush1.msra.mxu0 0.0
    %1283 = vmatprep.subr.mxu0 0.0
    %1284 = vmatpush1.msra.mxu0 0.0
    %1285 = vmatprep.subr.mxu0 0.0
    %1286 = vmatpush1.msra.mxu0 0.0
    %1287 = vmatprep.subr.mxu0 0.0
    %1288 = vmatpush1.msra.mxu0 0.0
    %1289 = vmatprep.subr.mxu0 0.0
    %1290 = vmatpush1.msra.mxu0 0.0
    %1291 = vmatprep.subr.mxu0 0.0
    %1292 = vmatpush1.msra.mxu0 0.0
    %1293 = vmatprep.mubr.f32.mxu0 0.0
    %v1294 = vand.u32 %v1046, 4294901760
    %v1295 = vsub.f32 %v1046, %v1294
    %1296 = vmatmul.mubr.f32.gmra.mrb[0].mxu0 %v1295
    %v1297 = vpop.f32.mrb[0].mxu0
    %v1298 = vadd.f32 %v1216, %v1297
    %v1299 = vpop.f32.mrb[0].mxu0
    %1300 = vmatprep.mubr.f32.mxu0 0.0
    %v1301 = vand.u32 %v1049, 4294901760
    %v1302 = vsub.f32 %v1049, %v1301
    %1303 = vmatmul.mubr.f32.gmra.mrb[0].mxu0 %v1302
    %v1304 = vpop.f32.mrb[0].mxu0
    %v1305 = vadd.f32 %v1222, %v1304
    %v1306 = vpop.f32.mrb[0].mxu0
    %1307 = vdwg.mxu0
    %1308 = vmatprep.subr.mxu0 0.0
    %v1309 = vand.u32 %v539, 4294901760
    %1310 = vmatpush1.msra.mxu0 %v1309
    %1311 = vmatprep.subr.mxu0 0.0
    %v1312 = vand.u32 %v540, 4294901760
    %1313 = vmatpush1.msra.mxu0 %v1312
    %1314 = vmatprep.subr.mxu0 0.0
    %1315 = vmatpush1.msra.mxu0 0.0
    %1316 = vmatprep.subr.mxu0 0.0
    %1317 = vmatpush1.msra.mxu0 0.0
    %1318 = vmatprep.subr.mxu0 0.0
    %1319 = vmatpush1.msra.mxu0 0.0
    %1320 = vmatprep.subr.mxu0 0.0
    %1321 = vmatpush1.msra.mxu0 0.0
    %1322 = vmatprep.subr.mxu0 0.0
    %1323 = vmatpush1.msra.mxu0 0.0
    %1324 = vmatprep.subr.mxu0 0.0
    %1325 = vmatpush1.msra.mxu0 0.0
    %1326 = vmatprep.subr.mxu0 0.0
    %1327 = vmatpush1.msra.mxu0 0.0
    %1328 = vmatprep.subr.mxu0 0.0
    %1329 = vmatpush1.msra.mxu0 0.0
    %1330 = vmatprep.subr.mxu0 0.0
    %1331 = vmatpush1.msra.mxu0 0.0
    %1332 = vmatprep.subr.mxu0 0.0
    %1333 = vmatpush1.msra.mxu0 0.0
    %1334 = vmatprep.subr.mxu0 0.0
    %1335 = vmatpush1.msra.mxu0 0.0
    %1336 = vmatprep.subr.mxu0 0.0
    %1337 = vmatpush1.msra.mxu0 0.0
    %1338 = vmatprep.subr.mxu0 0.0
    %1339 = vmatpush1.msra.mxu0 0.0
    %1340 = vmatprep.subr.mxu0 0.0
    %1341 = vmatpush1.msra.mxu0 0.0
    %1342 = vmatprep.subr.mxu0 0.0
    %1343 = vmatpush1.msra.mxu0 0.0
    %1344 = vmatprep.subr.mxu0 0.0
    %1345 = vmatpush1.msra.mxu0 0.0
    %1346 = vmatprep.subr.mxu0 0.0
    %1347 = vmatpush1.msra.mxu0 0.0
    %1348 = vmatprep.subr.mxu0 0.0
    %1349 = vmatpush1.msra.mxu0 0.0
    %1350 = vmatprep.subr.mxu0 0.0
    %1351 = vmatpush1.msra.mxu0 0.0
    %1352 = vmatprep.subr.mxu0 0.0
    %1353 = vmatpush1.msra.mxu0 0.0
    %1354 = vmatprep.subr.mxu0 0.0
    %1355 = vmatpush1.msra.mxu0 0.0
    %1356 = vmatprep.subr.mxu0 0.0
    %1357 = vmatpush1.msra.mxu0 0.0
    %1358 = vmatprep.subr.mxu0 0.0
    %1359 = vmatpush1.msra.mxu0 0.0
    %1360 = vmatprep.subr.mxu0 0.0
    %1361 = vmatpush1.msra.mxu0 0.0
    %1362 = vmatprep.subr.mxu0 0.0
    %1363 = vmatpush1.msra.mxu0 0.0
    %1364 = vmatprep.subr.mxu0 0.0
    %1365 = vmatpush1.msra.mxu0 0.0
    %1366 = vmatprep.subr.mxu0 0.0
    %1367 = vmatpush1.msra.mxu0 0.0
    %1368 = vmatprep.subr.mxu0 0.0
    %1369 = vmatpush1.msra.mxu0 0.0
    %1370 = vmatprep.subr.mxu0 0.0
    %1371 = vmatpush1.msra.mxu0 0.0
    %1372 = vmatprep.subr.mxu0 0.0
    %1373 = vmatpush1.msra.mxu0 0.0
    %1374 = vmatprep.mubr.f32.mxu0 0.0
    %v1375 = vand.u32 %v1046, 4294901760
    %v1376 = vsub.f32 %v1046, %v1375
    %v1377 = vand.u32 %v1376, 4294901760
    %1378 = vmatmul.mubr.f32.gmra.mrb[0].mxu0 %v1377
    %v1379 = vpop.f32.mrb[0].mxu0
    %v1380 = vadd.f32 %v1298, %v1379
    %v1381 = vpop.f32.mrb[0].mxu0
    %1382 = vmatprep.mubr.f32.mxu0 0.0
    %v1383 = vand.u32 %v1049, 4294901760
    %v1384 = vsub.f32 %v1049, %v1383
    %v1385 = vand.u32 %v1384, 4294901760
    %1386 = vmatmul.mubr.f32.gmra.mrb[0].mxu0 %v1385
    %v1387 = vpop.f32.mrb[0].mxu0
    %v1388 = vadd.f32 %v1305, %v1387
    %v1389 = vpop.f32.mrb[0].mxu0
    %1390 = vdwg.mxu0
    %1391 = vmatprep.subr.mxu0 0.0
    %v1392 = vand.u32 %v539, 4294901760
    %v1393 = vsub.f32 %v539, %v1392
    %v1394 = vand.u32 %v1393, 4294901760
    %1395 = vmatpush1.msra.mxu0 %v1394
    %1396 = vmatprep.subr.mxu0 0.0
    %v1397 = vand.u32 %v540, 4294901760
    %v1398 = vsub.f32 %v540, %v1397
    %v1399 = vand.u32 %v1398, 4294901760
    %1400 = vmatpush1.msra.mxu0 %v1399
    %1401 = vmatprep.subr.mxu0 0.0
    %1402 = vmatpush1.msra.mxu0 0.0
    %1403 = vmatprep.subr.mxu0 0.0
    %1404 = vmatpush1.msra.mxu0 0.0
    %1405 = vmatprep.subr.mxu0 0.0
    %1406 = vmatpush1.msra.mxu0 0.0
    %1407 = vmatprep.subr.mxu0 0.0
    %1408 = vmatpush1.msra.mxu0 0.0
    %1409 = vmatprep.subr.mxu0 0.0
    %1410 = vmatpush1.msra.mxu0 0.0
    %1411 = vmatprep.subr.mxu0 0.0
    %1412 = vmatpush1.msra.mxu0 0.0
    %1413 = vmatprep.subr.mxu0 0.0
    %1414 = vmatpush1.msra.mxu0 0.0
    %1415 = vmatprep.subr.mxu0 0.0
    %1416 = vmatpush1.msra.mxu0 0.0
    %1417 = vmatprep.subr.mxu0 0.0
    %1418 = vmatpush1.msra.mxu0 0.0
    %1419 = vmatprep.subr.mxu0 0.0
    %1420 = vmatpush1.msra.mxu0 0.0
    %1421 = vmatprep.subr.mxu0 0.0
    %1422 = vmatpush1.msra.mxu0 0.0
    %1423 = vmatprep.subr.mxu0 0.0
    %1424 = vmatpush1.msra.mxu0 0.0
    %1425 = vmatprep.subr.mxu0 0.0
    %1426 = vmatpush1.msra.mxu0 0.0
    %1427 = vmatprep.subr.mxu0 0.0
    %1428 = vmatpush1.msra.mxu0 0.0
    %1429 = vmatprep.subr.mxu0 0.0
    %1430 = vmatpush1.msra.mxu0 0.0
    %1431 = vmatprep.subr.mxu0 0.0
    %1432 = vmatpush1.msra.mxu0 0.0
    %1433 = vmatprep.subr.mxu0 0.0
    %1434 = vmatpush1.msra.mxu0 0.0
    %1435 = vmatprep.subr.mxu0 0.0
    %1436 = vmatpush1.msra.mxu0 0.0
    %1437 = vmatprep.subr.mxu0 0.0
    %1438 = vmatpush1.msra.mxu0 0.0
    %1439 = vmatprep.subr.mxu0 0.0
    %1440 = vmatpush1.msra.mxu0 0.0
    %1441 = vmatprep.subr.mxu0 0.0
    %1442 = vmatpush1.msra.mxu0 0.0
    %1443 = vmatprep.subr.mxu0 0.0
    %1444 = vmatpush1.msra.mxu0 0.0
    %1445 = vmatprep.subr.mxu0 0.0
    %1446 = vmatpush1.msra.mxu0 0.0
    %1447 = vmatprep.subr.mxu0 0.0
    %1448 = vmatpush1.msra.mxu0 0.0
    %1449 = vmatprep.subr.mxu0 0.0
    %1450 = vmatpush1.msra.mxu0 0.0
    %1451 = vmatprep.subr.mxu0 0.0
    %1452 = vmatpush1.msra.mxu0 0.0
    %1453 = vmatprep.subr.mxu0 0.0
    %1454 = vmatpush1.msra.mxu0 0.0
    %1455 = vmatprep.subr.mxu0 0.0
    %1456 = vmatpush1.msra.mxu0 0.0
    %1457 = vmatprep.subr.mxu0 0.0
    %1458 = vmatpush1.msra.mxu0 0.0
    %1459 = vmatprep.subr.mxu0 0.0
    %1460 = vmatpush1.msra.mxu0 0.0
    %1461 = vmatprep.mubr.f32.mxu0 0.0
    %v1462 = vand.u32 %v1046, 4294901760
    %1463 = vmatmul.mubr.f32.gmra.mrb[0].mxu0 %v1462
    %v1464 = vpop.f32.mrb[0].mxu0
    %v1465 = vadd.f32 %v1380, %v1464
    %v1466 = vpop.f32.mrb[0].mxu0
    %1467 = vmatprep.mubr.f32.mxu0 0.0
    %v1468 = vand.u32 %v1049, 4294901760
    %1469 = vmatmul.mubr.f32.gmra.mrb[0].mxu0 %v1468
    %v1470 = vpop.f32.mrb[0].mxu0
    %v1471 = vadd.f32 %v1388, %v1470
    %v1472 = vpop.f32.mrb[0].mxu0
    %1473 = vdwg.mxu0
    %1474 = vmatprep.subr.mxu0 0.0
    %v1475 = vand.u32 %v539, 4294901760
    %1476 = vmatpush1.msra.mxu0 %v1475
    %1477 = vmatprep.subr.mxu0 0.0
    %v1478 = vand.u32 %v540, 4294901760
    %1479 = vmatpush1.msra.mxu0 %v1478
    %1480 = vmatprep.subr.mxu0 0.0
    %1481 = vmatpush1.msra.mxu0 0.0
    %1482 = vmatprep.subr.mxu0 0.0
    %1483 = vmatpush1.msra.mxu0 0.0
    %1484 = vmatprep.subr.mxu0 0.0
    %1485 = vmatpush1.msra.mxu0 0.0
    %1486 = vmatprep.subr.mxu0 0.0
    %1487 = vmatpush1.msra.mxu0 0.0
    %1488 = vmatprep.subr.mxu0 0.0
    %1489 = vmatpush1.msra.mxu0 0.0
    %1490 = vmatprep.subr.mxu0 0.0
    %1491 = vmatpush1.msra.mxu0 0.0
    %1492 = vmatprep.subr.mxu0 0.0
    %1493 = vmatpush1.msra.mxu0 0.0
    %1494 = vmatprep.subr.mxu0 0.0
    %1495 = vmatpush1.msra.mxu0 0.0
    %1496 = vmatprep.subr.mxu0 0.0
    %1497 = vmatpush1.msra.mxu0 0.0
    %1498 = vmatprep.subr.mxu0 0.0
    %1499 = vmatpush1.msra.mxu0 0.0
    %1500 = vmatprep.subr.mxu0 0.0
    %1501 = vmatpush1.msra.mxu0 0.0
    %1502 = vmatprep.subr.mxu0 0.0
    %1503 = vmatpush1.msra.mxu0 0.0
    %1504 = vmatprep.subr.mxu0 0.0
    %1505 = vmatpush1.msra.mxu0 0.0
    %1506 = vmatprep.subr.mxu0 0.0
    %1507 = vmatpush1.msra.mxu0 0.0
    %1508 = vmatprep.subr.mxu0 0.0
    %1509 = vmatpush1.msra.mxu0 0.0
    %1510 = vmatprep.subr.mxu0 0.0
    %1511 = vmatpush1.msra.mxu0 0.0
    %1512 = vmatprep.subr.mxu0 0.0
    %1513 = vmatpush1.msra.mxu0 0.0
    %1514 = vmatprep.subr.mxu0 0.0
    %1515 = vmatpush1.msra.mxu0 0.0
    %1516 = vmatprep.subr.mxu0 0.0
    %1517 = vmatpush1.msra.mxu0 0.0
    %1518 = vmatprep.subr.mxu0 0.0
    %1519 = vmatpush1.msra.mxu0 0.0
    %1520 = vmatprep.subr.mxu0 0.0
    %1521 = vmatpush1.msra.mxu0 0.0
    %1522 = vmatprep.subr.mxu0 0.0
    %1523 = vmatpush1.msra.mxu0 0.0
    %1524 = vmatprep.subr.mxu0 0.0
    %1525 = vmatpush1.msra.mxu0 0.0
    %1526 = vmatprep.subr.mxu0 0.0
    %1527 = vmatpush1.msra.mxu0 0.0
    %1528 = vmatprep.subr.mxu0 0.0
    %1529 = vmatpush1.msra.mxu0 0.0
    %1530 = vmatprep.subr.mxu0 0.0
    %1531 = vmatpush1.msra.mxu0 0.0
    %1532 = vmatprep.subr.mxu0 0.0
    %1533 = vmatpush1.msra.mxu0 0.0
    %1534 = vmatprep.subr.mxu0 0.0
    %1535 = vmatpush1.msra.mxu0 0.0
    %1536 = vmatprep.subr.mxu0 0.0
    %1537 = vmatpush1.msra.mxu0 0.0
    %1538 = vmatprep.subr.mxu0 0.0
    %1539 = vmatpush1.msra.mxu0 0.0
    %1540 = vmatprep.mubr.f32.mxu0 0.0
    %v1541 = vand.u32 %v1046, 4294901760
    %1542 = vmatmul.mubr.f32.gmra.mrb[0].mxu0 %v1541
    %v1543 = vpop.f32.mrb[0].mxu0
    %v1544 = vadd.f32 %v1465, %v1543
    %v1545 = vpop.f32.mrb[0].mxu0
    %1546 = vmatprep.mubr.f32.mxu0 0.0
    %v1547 = vand.u32 %v1049, 4294901760
    %1548 = vmatmul.mubr.f32.gmra.mrb[0].mxu0 %v1547
    %v1549 = vpop.f32.mrb[0].mxu0
    %v1550 = vadd.f32 %v1471, %v1549
    %v1551 = vpop.f32.mrb[0].mxu0
    %1552 = vdwg.mxu0
    %vm1553 = vcmp.gt.f32.partialorder %v1544, 0.0
    %vm1554 = vcmp.gt.f32.partialorder %v1550, 0.0
    %v1555 = vmul.f32 %v1544, 0.2
    %v1556 = vmul.f32 %v1550, 0.2
    %v1557 = vsel %vm1553, %v1544, %v1555
    %v1558 = vsel %vm1554, %v1550, %v1556
    %v1559 = vrot.slane %v1557, 4
    %v1560 = vmax.f32 %v1557, %v1559
    %v1561 = vrot.slane %v1560, 2
    %v1562 = vmax.f32 %v1560, %v1561
    %v1563 = vrot.slane %v1562, 1
    %v1564 = vmax.f32 %v1562, %v1563
    %v1565 = vrot.slane %v1558, 4
    %v1566 = vmax.f32 %v1558, %v1565
    %v1567 = vrot.slane %v1566, 2
    %v1568 = vmax.f32 %v1566, %v1567
    %v1569 = vrot.slane %v1568, 1
    %v1570 = vmax.f32 %v1568, %v1569
    %v1571 = vsub.f32 %v1557, %v1564
    %v1572 = vsub.f32 %v1558, %v1570
    %v1573 = vmul.f32 %v1571, 1.442695
    %v1574 = vpow.pop %v1573
    %v1575 = vmul.f32 %v1572, 1.442695
    %v1576 = vpow.pop %v1575
    %v1577 = vrot.slane %v1574, 4
    %v1578 = vadd.f32 %v1574, %v1577
    %v1579 = vrot.slane %v1578, 2
    %v1580 = vadd.f32 %v1578, %v1579
    %v1581 = vrot.slane %v1580, 1
    %v1582 = vadd.f32 %v1580, %v1581
    %v1583 = vrot.slane %v1576, 4
    %v1584 = vadd.f32 %v1576, %v1583
    %v1585 = vrot.slane %v1584, 2
    %v1586 = vadd.f32 %v1584, %v1585
    %v1587 = vrot.slane %v1586, 1
    %v1588 = vadd.f32 %v1586, %v1587
    %v1589 = vrcp.pop %v1582
    %v1590 = vrcp.pop %v1588
    %v1591 = vmul.f32 %v1582, %v1589
    %v1592 = vmul.f32 %v1588, %v1590
    %v1593 = vsub.f32 2.0, %v1591
    %v1594 = vsub.f32 2.0, %v1592
    %v1595 = vmul.f32 %v1589, %v1593
    %v1596 = vmul.f32 %v1590, %v1594
    %v1597 = vmul.f32 %v1574, %v1595
    %v1598 = vmul.f32 %v1576, %v1596
    %v1599 = vmul.f32 %v1597, %v530
    %v1600 = vmul.f32 %v1598, %v536
    %v1601 = vrot.slane %v1599, 4
    %v1602 = vadd.f32 %v1599, %v1601
    %v1603 = vrot.slane %v1602, 2
    %v1604 = vadd.f32 %v1602, %v1603
    %v1605 = vrot.slane %v1604, 1
    %v1606 = vadd.f32 %v1604, %v1605
    %v1607 = vrot.slane %v1600, 4
    %v1608 = vadd.f32 %v1600, %v1607
    %v1609 = vrot.slane %v1608, 2
    %v1610 = vadd.f32 %v1608, %v1609
    %v1611 = vrot.slane %v1610, 1
    %v1612 = vadd.f32 %v1610, %v1611
    %1615 = vrot.lane.b32.xlu0 %v1606, 96
    %v1616 = vpop.permute.xlu0 %1615
    %1617 = vrot.lane.b32.xlu0 %v1612, 96
    %v1618 = vpop.permute.xlu0 %1617
    %v1621 = vadd.f32 %v1606, %v1616
    %v1622 = vadd.f32 %v1612, %v1618
    %1623 = vrot.lane.b32.xlu0 %v1606, 64
    %v1624 = vpop.permute.xlu0 %1623
    %1625 = vrot.lane.b32.xlu0 %v1612, 64
    %v1626 = vpop.permute.xlu0 %1625
    %v1629 = vadd.f32 %v1621, %v1624
    %v1630 = vadd.f32 %v1622, %v1626
    %1631 = vrot.lane.b32.xlu0 %v1606, 32
    %v1632 = vpop.permute.xlu0 %1631
    %1633 = vrot.lane.b32.xlu0 %v1612, 32
    %v1634 = vpop.permute.xlu0 %1633
    %v1637 = vadd.f32 %v1629, %v1632
    %v1638 = vadd.f32 %v1630, %v1634
    %v1639 = vmul.f32 %v1637, 0.25
    %v1640 = vmul.f32 %v1638, 0.25
    %v1641 = vmax.f32 %v1639, 0.0
    %v1642 = vmax.f32 %v1640, 0.0
    %v1643 = vld [vmem:[%s5] sm:$0x1]
    %v1645 = vlaneseq
    %v1646 = vshrl.u32 %v1645, 7
    %v1647 = vsub.s32 0, %v1646
    %v1648 = vrot.slane %v1643, %v1647
    %v1650 = vadd.f32 %v1641, %v1648
    %v1651 = vadd.f32 %v1642, %v1648
    %v1654 = vrot.slane %v1651, 7
    %vm1655 = vcmask 1041409
    %v1656 = vsel %vm1655, %v1654, %v1650
    %vm1658 = vcmask 254976
    %1659 = vst.msk [vmem:[#allocation2] sm:$0x3] %vm1658, %v1656
    // Predicated region
    $region26: #{gat_forward.1} parent=1 // pred_check
      _
    $region27: #{gat_forward.1} parent=1 // pred_check_branch
      %1661 = sbr.rel (0) target = $region29
    $region28: #{gat_forward.1} parent=1 // pred_region
      %s1663 = ssub.s32 32, 32
      %1664 = vsyncadd [#allocation3], %s1663
      %s1666 = sshll.u32 [#allocation2], 4
      %s1667 = int_to_ptr.vmem [resolvable:$true] %s1666
      %1669 = dma.vmem_to_hbm [thread:$0]  %s1667, 32, %s6, [#allocation3]
    $region29: #{gat_forward.1} parent=1 // pred_fallthru
      _
    // Predicated region
    $region30: #{gat_forward.1} parent=1 // pred_check
      _
    $region31: #{gat_forward.1} parent=1 // pred_check_branch
      %1671 = sbr.rel (0) target = $region33
    $region32: #{gat_forward.1} parent=1 // pred_region
      %1672 = dma.done [#allocation3], 32
    $region33: #{gat_forward.1} parent=1 // pred_fallthru
      _
    %1673 = vsyncpa [#allocation3], 1

</llo_original>
